<compile_context>
chip_gen: v7x
topology: tpu7x:2x2x1
jax: 0.10.0
libtpu: 0.0.40
codegen_flags: <defaults>
</compile_context>

<pallas_src>
import functools

import jax
import jax.numpy as jnp
from jax.experimental import pallas as pl
from jax.experimental.pallas import tpu as pltpu


# ----------------------------------------------------------------------------
# Host-side (one-time) weight re-layout helpers — pure layout plumbing.
# ----------------------------------------------------------------------------
def _fused_banded_conv_weight(w, w_in, w_out, pad):
    """Fold a (Cout, Cin, KH, KW) stride-1 conv weight into ONE banded matrix.

    Returns B of shape (KH*W_in*Cin, W_out*Cout) with
      B[kh*W_in*Cin + q*Cin + ci, r*Cout + co] = w[co, ci, kh, q - r + pad]
        if 0 <= q - r + pad < KW else 0,
    so that for the height-tap-stacked activation matrix
      LHS[m, kh*W_in*Cin + q*Cin + ci] = x_hpad[image(m), out_row(m)+kh, q, ci]
    the whole conv layer is a single matmul LHS @ B.  Horizontal zero padding
    is absorbed by the band clipping; vertical padding lives in x_hpad.
    """
    cout, cin, kh, kw = w.shape
    q = jnp.arange(w_in)[None, :, None]      # input width coordinate
    r = jnp.arange(w_out)[None, None, :]     # output width coordinate
    t = jnp.arange(kw)[:, None, None]        # kernel tap
    sel = (q == r + t - pad).astype(w.dtype)               # (KW, Win, Wout)
    b = jnp.einsum('xqr,ocyx->yqcro', sel, w)               # (KH, Win, Cin, Wout, Cout)
    return b.reshape(kh * w_in * cin, w_out * cout)


def _zero_map(ndim):
    return lambda i: (0,) * ndim


# ----------------------------------------------------------------------------
# The fused kernel body (single grid step; batch folded into the M dimension).
# ----------------------------------------------------------------------------
def _fused_forward_kernel(*refs, meta):
    (batch, n_conv, n_fc, channels, ksizes, pads, hs, ws) = meta
    B = batch

    # ---- unpack refs (inputs..., output, scratches...) ----
    x_ref = refs[0]
    conv_w = [refs[1 + 2 * i] for i in range(n_conv)]
    conv_b = [refs[2 + 2 * i] for i in range(n_conv)]
    base = 1 + 2 * n_conv
    fc_w = [refs[base + 2 * i] for i in range(n_fc)]
    fc_b = [refs[base + 2 * i + 1] for i in range(n_fc)]
    o_ref = refs[base + 2 * n_fc]
    scr = list(refs[base + 2 * n_fc + 1:])
    lhs_scr = scr[:n_conv]                  # im2row LHS per conv layer
    pad_scr = scr[n_conv:2 * n_conv - 1]    # height-padded inputs, conv layers 1..
    flat_scr = scr[2 * n_conv - 1]          # (B, flat_dim) MLP input

    # Zero ONLY the vertical-padding halo row-blocks (interiors are fully
    # rewritten below every call, so this is the only zero fill needed).
    for li in range(1, n_conv):
        p, h, wcol = pads[li], hs[li], ws[li] * channels[li]
        if p > 0:
            pad_scr[li - 1][0:p * B, :] = jnp.zeros((p * B, wcol), jnp.float32)
            pad_scr[li - 1][(p + h) * B:(2 * p + h) * B, :] = jnp.zeros(
                (p * B, wcol), jnp.float32)

    # ---- conv stack: ONE fused matmul per conv layer ------------------------
    # Activation rows are batch-interleaved (row = padded_row * B + n), so the
    # batch rides along the MXU M dimension and every height-tap slab is a
    # plain contiguous row-block slice.
    src = x_ref                                       # height-padded input rows
    conv_out = None
    for li in range(n_conv):
        ho, wo, cout = hs[li + 1], ws[li + 1], channels[li + 1]
        wcol_in = ws[li] * channels[li]
        # im2row over the KH height taps: KH strided row-block copies.
        for kh in range(ksizes[li]):
            lhs_scr[li][:, kh * wcol_in:(kh + 1) * wcol_in] = (
                src[kh * B:(kh + ho) * B, :])
        y = jnp.dot(lhs_scr[li][...].astype(jnp.bfloat16), conv_w[li][...],
                    preferred_element_type=jnp.float32) + conv_b[li][...]
        if li + 1 < n_conv:
            y = jnp.maximum(y, 0.0)                   # ReLU between convs only
            p_next = pads[li + 1]
            pad_scr[li][p_next * B:(p_next + ho) * B, :] = y
            src = pad_scr[li]
        else:
            conv_out = y                              # (B*h_last, w_last*c_last) f32

    # ---- per-image flatten for the MLP --------------------------------------
    # flat[n, r*wcol + c] = conv_out[r*B + n, c]; 128-aligned column stores.
    # (The PyTorch NCHW-flatten order is folded into fc0's weight host-side.)
    h_last = hs[n_conv]
    wcol_last = ws[n_conv] * channels[n_conv]
    for r in range(h_last):
        flat_scr[:, r * wcol_last:(r + 1) * wcol_last] = (
            conv_out[r * B:(r + 1) * B, :])

    # ---- MLP: one (B, flat) @ (flat, h1) contraction, then tiny matmuls -----
    hid = jnp.dot(flat_scr[...].astype(jnp.bfloat16), fc_w[0][...],
                  preferred_element_type=jnp.float32) + fc_b[0][...]
    for li in range(1, n_fc):
        hid = jnp.maximum(hid, 0.0)
        hid = jnp.dot(hid.astype(jnp.bfloat16), fc_w[li][...],
                      preferred_element_type=jnp.float32) + fc_b[li][...]

    o_ref[...] = hid.astype(o_ref.dtype)


# ----------------------------------------------------------------------------
# Wrapper: host-side layout prep + a single pallas_call.
# ----------------------------------------------------------------------------
def cnn_mlp_forward(x, conv_params, lin_params):
    """Forward pass of CNN_MLP(channels, kernel_sizes, paddings, sizes).

    x:           (N, C0, H, W) float32, NCHW (PyTorch layout).
    conv_params: list of (w (Cout,Cin,KH,KW), b (Cout,), padding:int), stride 1.
    lin_params:  list of (w (in,out), b (out,))  — i.e. y = x @ w + b.
    """
    batch, c0, h0, w0 = x.shape
    n_conv = len(conv_params)
    n_fc = len(lin_params)
    channels = [c0] + [w.shape[0] for (w, _, _) in conv_params]
    ksizes = [w.shape[2] for (w, _, _) in conv_params]
    pads = [p for (_, _, p) in conv_params]
    sizes = [lin_params[0][0].shape[0]] + [w.shape[1] for (w, _) in lin_params]

    # Per-layer spatial sizes (stride-1 convs).
    hs, ws = [h0], [w0]
    for i in range(n_conv):
        hs.append(hs[-1] + 2 * pads[i] - ksizes[i] + 1)
        ws.append(ws[-1] + 2 * pads[i] - ksizes[i] + 1)
    c_last, h_last, w_last = channels[-1], hs[-1], ws[-1]
    flat_dim = c_last * h_last * w_last
    assert sizes[0] == flat_dim

    # ---- host-side, one-time layout prep (tiny tensors) ----
    p0 = pads[0]
    # NCHW -> (H, N, W, C): batch interleaved into the row axis (row = h*B + n),
    # then height-padded; the kernel only ever needs contiguous row blocks.
    xr = jnp.transpose(x, (2, 0, 3, 1))
    xr = jnp.pad(xr, ((p0, p0), (0, 0), (0, 0), (0, 0)))
    x_rows = xr.reshape((h0 + 2 * p0) * batch, w0 * c0).astype(jnp.float32)

    inputs = [x_rows]
    for i, (w, b, p) in enumerate(conv_params):
        bw = _fused_banded_conv_weight(w, ws[i], ws[i + 1], p).astype(jnp.bfloat16)
        brow = jnp.tile(b, ws[i + 1])[None, :].astype(jnp.float32)
        inputs += [bw, brow]

    # fc0 weight: permute PyTorch NCHW-flatten rows into the kernel's
    # (row, width*channel) flatten order, shaped (H_last*W_last*C_last, out).
    fw0, fb0 = lin_params[0]
    fw0_p = (fw0.reshape(c_last, h_last, w_last, sizes[1])
                .transpose(1, 2, 0, 3)
                .reshape(flat_dim, sizes[1])).astype(jnp.bfloat16)
    inputs += [fw0_p, fb0[None, :].astype(jnp.float32)]
    for (w, b) in lin_params[1:]:
        inputs += [w.astype(jnp.bfloat16), b[None, :].astype(jnp.float32)]

    # Scratches: im2row LHS per conv layer, height-padded inputs for layers 1..,
    # and the flattened conv-output activation that feeds the MLP.
    scratch = []
    for i in range(n_conv):
        scratch.append(pltpu.VMEM(
            (batch * hs[i + 1], ksizes[i] * ws[i] * channels[i]), jnp.float32))
    for i in range(1, n_conv):
        scratch.append(pltpu.VMEM(
            (batch * (hs[i] + 2 * pads[i]), ws[i] * channels[i]), jnp.float32))
    scratch.append(pltpu.VMEM((batch, flat_dim), jnp.float32))

    meta = (batch, n_conv, n_fc, tuple(channels), tuple(ksizes), tuple(pads),
            tuple(hs), tuple(ws))
    kernel = functools.partial(_fused_forward_kernel, meta=meta)

    in_specs = [pl.BlockSpec(a.shape, _zero_map(a.ndim)) for a in inputs]

    return pl.pallas_call(
        kernel,
        out_shape=jax.ShapeDtypeStruct((batch, sizes[-1]), jnp.float32),
        grid_spec=pltpu.PrefetchScalarGridSpec(
            num_scalar_prefetch=0,
            grid=(1,),
            in_specs=in_specs,
            out_specs=pl.BlockSpec((batch, sizes[-1]), lambda i: (0, 0)),
            scratch_shapes=scratch,
        ),
        compiler_params=pltpu.CompilerParams(
            dimension_semantics=("arbitrary",)),
    )(*inputs)


# ----------------------------------------------------------------------------
# Pure-JAX reference (for a correctness self-check).
# ----------------------------------------------------------------------------
def _reference_forward(x, conv_params, lin_params):
    h = x
    for i, (w, b, p) in enumerate(conv_params):
        h = jax.lax.conv_general_dilated(
            h, w, window_strides=(1, 1), padding=[(p, p), (p, p)],
            dimension_numbers=('NCHW', 'OIHW', 'NCHW'))
        h = h + b[None, :, None, None]
        if i != len(conv_params) - 1:
            h = jnp.maximum(h, 0.0)
    h = h.reshape(h.shape[0], -1)
    for i, (w, b) in enumerate(lin_params):
        h = h @ w + b
        if i != len(lin_params) - 1:
            h = jnp.maximum(h, 0.0)
    return h


if __name__ == "__main__":
    # Module config: CNN_MLP(channels=(4,8,8), kernel_sizes=(3,3),
    #                        paddings=(1,1), sizes=(8*16*16, 32, 10))
    channels = (4, 8, 8)
    kernel_sizes = (3, 3)
    paddings = (1, 1)
    N, H, W = 2, 16, 16
    flat_dim = channels[-1] * H * W          # K=3, P=1 keeps spatial size
    sizes = (flat_dim, 32, 10)

    key = jax.random.PRNGKey(0)
    keys = jax.random.split(key, 16)
    ki = 0

    conv_params = []
    for i in range(1, len(channels)):
        cin, cout = channels[i - 1], channels[i]
        k, p = kernel_sizes[i - 1], paddings[i - 1]
        bound = 1.0 / (cin * k * k) ** 0.5
        w = jax.random.uniform(keys[ki], (cout, cin, k, k), jnp.float32,
                               -bound, bound); ki += 1
        b = jax.random.uniform(keys[ki], (cout,), jnp.float32,
                               -bound, bound); ki += 1
        conv_params.append((w, b, p))

    lin_params = []
    for i in range(1, len(sizes)):
        fin, fout = sizes[i - 1], sizes[i]
        bound = 1.0 / fin ** 0.5
        w = jax.random.uniform(keys[ki], (fin, fout), jnp.float32,
                               -bound, bound); ki += 1
        b = jax.random.uniform(keys[ki], (fout,), jnp.float32,
                               -bound, bound); ki += 1
        lin_params.append((w, b))

    x = jax.random.normal(keys[ki], (N, channels[0], H, W), jnp.float32)

    fwd = jax.jit(lambda xx: cnn_mlp_forward(xx, conv_params, lin_params))
    out = jax.block_until_ready(fwd(x))
    assert out.shape == (N, sizes[-1])
    assert out.dtype == jnp.float32

    # Correctness self-check against a pure-JAX reference (tolerance covers
    # bf16 matmul-operand rounding, not layout bugs).
    ref = _reference_forward(x, conv_params, lin_params)
    max_err = float(jnp.max(jnp.abs(out - ref)))
    assert max_err < 2e-2, f"mismatch vs reference: max |diff| = {max_err}"

    print("KERNEL_OK")
</pallas_src>

<mosaic_0001>
module attributes {stable_mosaic.version = 11 : i64} {
  func.func @_fused_forward_kernel(%arg0: i32, %arg1: memref<36x64xf32, #tpu.memory_space<vmem>>, %arg2: memref<192x128xbf16, #tpu.memory_space<vmem>>, %arg3: memref<1x128xf32, #tpu.memory_space<vmem>>, %arg4: memref<384x128xbf16, #tpu.memory_space<vmem>>, %arg5: memref<1x128xf32, #tpu.memory_space<vmem>>, %arg6: memref<2048x32xbf16, #tpu.memory_space<vmem>>, %arg7: memref<1x32xf32, #tpu.memory_space<vmem>>, %arg8: memref<32x10xbf16, #tpu.memory_space<vmem>>, %arg9: memref<1x10xf32, #tpu.memory_space<vmem>>, %arg10: memref<2x10xf32, #tpu.memory_space<vmem>>, %arg11: memref<32x192xf32, #tpu.memory_space<vmem>>, %arg12: memref<32x384xf32, #tpu.memory_space<vmem>>, %arg13: memref<36x128xf32, #tpu.memory_space<vmem>>, %arg14: memref<2x2048xf32, #tpu.memory_space<vmem>>) attributes {dimension_semantics = [#tpu.dimension_semantics<arbitrary>], iteration_bounds = array<i64: 1>, scalar_prefetch = 0 : i64, scratch_operands = 4 : i64, tpu.core_type = #tpu.core_type<tc>, window_params = [{pipeline_mode = #tpu.pipeline_mode<synchronous>, transform_indices = @transform_0, window_bounds = array<i64: 36, 64>}, {pipeline_mode = #tpu.pipeline_mode<synchronous>, transform_indices = @transform_1, window_bounds = array<i64: 192, 128>}, {pipeline_mode = #tpu.pipeline_mode<synchronous>, transform_indices = @transform_2, window_bounds = array<i64: 1, 128>}, {pipeline_mode = #tpu.pipeline_mode<synchronous>, transform_indices = @transform_3, window_bounds = array<i64: 384, 128>}, {pipeline_mode = #tpu.pipeline_mode<synchronous>, transform_indices = @transform_4, window_bounds = array<i64: 1, 128>}, {pipeline_mode = #tpu.pipeline_mode<synchronous>, transform_indices = @transform_5, window_bounds = array<i64: 2048, 32>}, {pipeline_mode = #tpu.pipeline_mode<synchronous>, transform_indices = @transform_6, window_bounds = array<i64: 1, 32>}, {pipeline_mode = #tpu.pipeline_mode<synchronous>, transform_indices = @transform_7, window_bounds = array<i64: 32, 10>}, {pipeline_mode = #tpu.pipeline_mode<synchronous>, transform_indices = @transform_8, window_bounds = array<i64: 1, 10>}, {pipeline_mode = #tpu.pipeline_mode<synchronous>, transform_indices = @transform_9, window_bounds = array<i64: 2, 10>}]} {
    %cst = arith.constant 0.000000e+00 : f32
    %0 = vector.broadcast %cst : f32 to vector<2x128xf32>
    %c0 = arith.constant 0 : index
    %c0_0 = arith.constant 0 : index
    %1 = vector.load %arg13[%c0, %c0_0] : memref<36x128xf32, #tpu.memory_space<vmem>>, vector<2x128xf32>
    tpu.vector_store %arg13[%c0, %c0_0], %0 {strides = array<i32>} : memref<36x128xf32, #tpu.memory_space<vmem>>, vector<2x128xf32>,
    %cst_1 = arith.constant 0.000000e+00 : f32
    %2 = vector.broadcast %cst_1 : f32 to vector<2x128xf32>
    %c34 = arith.constant 34 : index
    %c0_2 = arith.constant 0 : index
    %3 = vector.load %arg13[%c34, %c0_2] : memref<36x128xf32, #tpu.memory_space<vmem>>, vector<2x128xf32>
    tpu.vector_store %arg13[%c34, %c0_2], %2 {strides = array<i32>} : memref<36x128xf32, #tpu.memory_space<vmem>>, vector<2x128xf32>,
    %c0_3 = arith.constant 0 : index
    %c0_4 = arith.constant 0 : index
    %4 = vector.load %arg1[%c0_3, %c0_4] : memref<36x64xf32, #tpu.memory_space<vmem>>, vector<32x64xf32>
    %c0_5 = arith.constant 0 : index
    %c0_6 = arith.constant 0 : index
    %5 = vector.load %arg11[%c0_5, %c0_6] : memref<32x192xf32, #tpu.memory_space<vmem>>, vector<32x64xf32>
    tpu.vector_store %arg11[%c0_5, %c0_6], %4 {strides = array<i32>} : memref<32x192xf32, #tpu.memory_space<vmem>>, vector<32x64xf32>,
    %c2 = arith.constant 2 : index
    %c0_7 = arith.constant 0 : index
    %6 = vector.load %arg1[%c2, %c0_7] : memref<36x64xf32, #tpu.memory_space<vmem>>, vector<32x64xf32>
    %c0_8 = arith.constant 0 : index
    %c64 = arith.constant 64 : index
    %7 = vector.load %arg11[%c0_8, %c64] : memref<32x192xf32, #tpu.memory_space<vmem>>, vector<32x64xf32>
    tpu.vector_store %arg11[%c0_8, %c64], %6 {strides = array<i32>} : memref<32x192xf32, #tpu.memory_space<vmem>>, vector<32x64xf32>,
    %c4 = arith.constant 4 : index
    %c0_9 = arith.constant 0 : index
    %8 = vector.load %arg1[%c4, %c0_9] : memref<36x64xf32, #tpu.memory_space<vmem>>, vector<32x64xf32>
    %c0_10 = arith.constant 0 : index
    %c128 = arith.constant 128 : index
    %9 = vector.load %arg11[%c0_10, %c128] : memref<32x192xf32, #tpu.memory_space<vmem>>, vector<32x64xf32>
    tpu.vector_store %arg11[%c0_10, %c128], %8 {strides = array<i32>} : memref<32x192xf32, #tpu.memory_space<vmem>>, vector<32x64xf32>,
    %c0_11 = arith.constant 0 : index
    %c0_12 = arith.constant 0 : index
    %10 = vector.load %arg11[%c0_11, %c0_12] : memref<32x192xf32, #tpu.memory_space<vmem>>, vector<32x192xf32>
    %11 = arith.truncf %10 : vector<32x192xf32> to vector<32x192xbf16>
    %c0_13 = arith.constant 0 : index
    %c0_14 = arith.constant 0 : index
    %12 = vector.load %arg2[%c0_13, %c0_14] : memref<192x128xbf16, #tpu.memory_space<vmem>>, vector<192x128xbf16>
    %cst_15 = arith.constant dense<0.000000e+00> : vector<32x128xf32>
    %13 = tpu.matmul %11, %12, %cst_15 {dimension_numbers = #tpu.dot_dimension_numbers<[1], [0], [0], [1], [0, 0, 1, 1], [], []>} : vector<32x192xbf16>, vector<192x128xbf16>, vector<32x128xf32> -> vector<32x128xf32>
    %c0_16 = arith.constant 0 : index
    %c0_17 = arith.constant 0 : index
    %14 = vector.load %arg3[%c0_16, %c0_17] : memref<1x128xf32, #tpu.memory_space<vmem>>, vector<1x128xf32>
    %15 = vector.broadcast %14 : vector<1x128xf32> to vector<32x128xf32>
    %16 = arith.addf %13, %15 : vector<32x128xf32>
    %cst_18 = arith.constant 0.000000e+00 : f32
    %17 = vector.broadcast %cst_18 : f32 to vector<32x128xf32>
    %18 = arith.maximumf %16, %17 : vector<32x128xf32>
    %c2_19 = arith.constant 2 : index
    %c0_20 = arith.constant 0 : index
    %19 = vector.load %arg13[%c2_19, %c0_20] : memref<36x128xf32, #tpu.memory_space<vmem>>, vector<32x128xf32>
    tpu.vector_store %arg13[%c2_19, %c0_20], %18 {strides = array<i32>} : memref<36x128xf32, #tpu.memory_space<vmem>>, vector<32x128xf32>,
    %c0_21 = arith.constant 0 : index
    %c0_22 = arith.constant 0 : index
    %20 = vector.load %arg13[%c0_21, %c0_22] : memref<36x128xf32, #tpu.memory_space<vmem>>, vector<32x128xf32>
    %c0_23 = arith.constant 0 : index
    %c0_24 = arith.constant 0 : index
    %21 = vector.load %arg12[%c0_23, %c0_24] : memref<32x384xf32, #tpu.memory_space<vmem>>, vector<32x128xf32>
    tpu.vector_store %arg12[%c0_23, %c0_24], %20 {strides = array<i32>} : memref<32x384xf32, #tpu.memory_space<vmem>>, vector<32x128xf32>,
    %c2_25 = arith.constant 2 : index
    %c0_26 = arith.constant 0 : index
    %22 = vector.load %arg13[%c2_25, %c0_26] : memref<36x128xf32, #tpu.memory_space<vmem>>, vector<32x128xf32>
    %c0_27 = arith.constant 0 : index
    %c128_28 = arith.constant 128 : index
    %23 = vector.load %arg12[%c0_27, %c128_28] : memref<32x384xf32, #tpu.memory_space<vmem>>, vector<32x128xf32>
    tpu.vector_store %arg12[%c0_27, %c128_28], %22 {strides = array<i32>} : memref<32x384xf32, #tpu.memory_space<vmem>>, vector<32x128xf32>,
    %c4_29 = arith.constant 4 : index
    %c0_30 = arith.constant 0 : index
    %24 = vector.load %arg13[%c4_29, %c0_30] : memref<36x128xf32, #tpu.memory_space<vmem>>, vector<32x128xf32>
    %c0_31 = arith.constant 0 : index
    %c256 = arith.constant 256 : index
    %25 = vector.load %arg12[%c0_31, %c256] : memref<32x384xf32, #tpu.memory_space<vmem>>, vector<32x128xf32>
    tpu.vector_store %arg12[%c0_31, %c256], %24 {strides = array<i32>} : memref<32x384xf32, #tpu.memory_space<vmem>>, vector<32x128xf32>,
    %c0_32 = arith.constant 0 : index
    %c0_33 = arith.constant 0 : index
    %26 = vector.load %arg12[%c0_32, %c0_33] : memref<32x384xf32, #tpu.memory_space<vmem>>, vector<32x384xf32>
    %27 = arith.truncf %26 : vector<32x384xf32> to vector<32x384xbf16>
    %c0_34 = arith.constant 0 : index
    %c0_35 = arith.constant 0 : index
    %28 = vector.load %arg4[%c0_34, %c0_35] : memref<384x128xbf16, #tpu.memory_space<vmem>>, vector<384x128xbf16>
    %cst_36 = arith.constant dense<0.000000e+00> : vector<32x128xf32>
    %29 = tpu.matmul %27, %28, %cst_36 {dimension_numbers = #tpu.dot_dimension_numbers<[1], [0], [0], [1], [0, 0, 1, 1], [], []>} : vector<32x384xbf16>, vector<384x128xbf16>, vector<32x128xf32> -> vector<32x128xf32>
    %c0_37 = arith.constant 0 : index
    %c0_38 = arith.constant 0 : index
    %30 = vector.load %arg5[%c0_37, %c0_38] : memref<1x128xf32, #tpu.memory_space<vmem>>, vector<1x128xf32>
    %31 = vector.broadcast %30 : vector<1x128xf32> to vector<32x128xf32>
    %32 = arith.addf %29, %31 : vector<32x128xf32>
    %33 = vector.extract_strided_slice %32 {offsets = [0, 0], sizes = [2, 128], strides = [1, 1]} : vector<32x128xf32> to vector<2x128xf32>
    %c0_39 = arith.constant 0 : index
    %c0_40 = arith.constant 0 : index
    %34 = vector.load %arg14[%c0_39, %c0_40] : memref<2x2048xf32, #tpu.memory_space<vmem>>, vector<2x128xf32>
    tpu.vector_store %arg14[%c0_39, %c0_40], %33 {strides = array<i32>} : memref<2x2048xf32, #tpu.memory_space<vmem>>, vector<2x128xf32>,
    %35 = vector.extract_strided_slice %32 {offsets = [2, 0], sizes = [2, 128], strides = [1, 1]} : vector<32x128xf32> to vector<2x128xf32>
    %c0_41 = arith.constant 0 : index
    %c128_42 = arith.constant 128 : index
    %36 = vector.load %arg14[%c0_41, %c128_42] : memref<2x2048xf32, #tpu.memory_space<vmem>>, vector<2x128xf32>
    tpu.vector_store %arg14[%c0_41, %c128_42], %35 {strides = array<i32>} : memref<2x2048xf32, #tpu.memory_space<vmem>>, vector<2x128xf32>,
    %37 = vector.extract_strided_slice %32 {offsets = [4, 0], sizes = [2, 128], strides = [1, 1]} : vector<32x128xf32> to vector<2x128xf32>
    %c0_43 = arith.constant 0 : index
    %c256_44 = arith.constant 256 : index
    %38 = vector.load %arg14[%c0_43, %c256_44] : memref<2x2048xf32, #tpu.memory_space<vmem>>, vector<2x128xf32>
    tpu.vector_store %arg14[%c0_43, %c256_44], %37 {strides = array<i32>} : memref<2x2048xf32, #tpu.memory_space<vmem>>, vector<2x128xf32>,
    %39 = vector.extract_strided_slice %32 {offsets = [6, 0], sizes = [2, 128], strides = [1, 1]} : vector<32x128xf32> to vector<2x128xf32>
    %c0_45 = arith.constant 0 : index
    %c384 = arith.constant 384 : index
    %40 = vector.load %arg14[%c0_45, %c384] : memref<2x2048xf32, #tpu.memory_space<vmem>>, vector<2x128xf32>
    tpu.vector_store %arg14[%c0_45, %c384], %39 {strides = array<i32>} : memref<2x2048xf32, #tpu.memory_space<vmem>>, vector<2x128xf32>,
    %41 = vector.extract_strided_slice %32 {offsets = [8, 0], sizes = [2, 128], strides = [1, 1]} : vector<32x128xf32> to vector<2x128xf32>
    %c0_46 = arith.constant 0 : index
    %c512 = arith.constant 512 : index
    %42 = vector.load %arg14[%c0_46, %c512] : memref<2x2048xf32, #tpu.memory_space<vmem>>, vector<2x128xf32>
    tpu.vector_store %arg14[%c0_46, %c512], %41 {strides = array<i32>} : memref<2x2048xf32, #tpu.memory_space<vmem>>, vector<2x128xf32>,
    %43 = vector.extract_strided_slice %32 {offsets = [10, 0], sizes = [2, 128], strides = [1, 1]} : vector<32x128xf32> to vector<2x128xf32>
    %c0_47 = arith.constant 0 : index
    %c640 = arith.constant 640 : index
    %44 = vector.load %arg14[%c0_47, %c640] : memref<2x2048xf32, #tpu.memory_space<vmem>>, vector<2x128xf32>
    tpu.vector_store %arg14[%c0_47, %c640], %43 {strides = array<i32>} : memref<2x2048xf32, #tpu.memory_space<vmem>>, vector<2x128xf32>,
    %45 = vector.extract_strided_slice %32 {offsets = [12, 0], sizes = [2, 128], strides = [1, 1]} : vector<32x128xf32> to vector<2x128xf32>
    %c0_48 = arith.constant 0 : index
    %c768 = arith.constant 768 : index
    %46 = vector.load %arg14[%c0_48, %c768] : memref<2x2048xf32, #tpu.memory_space<vmem>>, vector<2x128xf32>
    tpu.vector_store %arg14[%c0_48, %c768], %45 {strides = array<i32>} : memref<2x2048xf32, #tpu.memory_space<vmem>>, vector<2x128xf32>,
    %47 = vector.extract_strided_slice %32 {offsets = [14, 0], sizes = [2, 128], strides = [1, 1]} : vector<32x128xf32> to vector<2x128xf32>
    %c0_49 = arith.constant 0 : index
    %c896 = arith.constant 896 : index
    %48 = vector.load %arg14[%c0_49, %c896] : memref<2x2048xf32, #tpu.memory_space<vmem>>, vector<2x128xf32>
    tpu.vector_store %arg14[%c0_49, %c896], %47 {strides = array<i32>} : memref<2x2048xf32, #tpu.memory_space<vmem>>, vector<2x128xf32>,
    %49 = vector.extract_strided_slice %32 {offsets = [16, 0], sizes = [2, 128], strides = [1, 1]} : vector<32x128xf32> to vector<2x128xf32>
    %c0_50 = arith.constant 0 : index
    %c1024 = arith.constant 1024 : index
    %50 = vector.load %arg14[%c0_50, %c1024] : memref<2x2048xf32, #tpu.memory_space<vmem>>, vector<2x128xf32>
    tpu.vector_store %arg14[%c0_50, %c1024], %49 {strides = array<i32>} : memref<2x2048xf32, #tpu.memory_space<vmem>>, vector<2x128xf32>,
    %51 = vector.extract_strided_slice %32 {offsets = [18, 0], sizes = [2, 128], strides = [1, 1]} : vector<32x128xf32> to vector<2x128xf32>
    %c0_51 = arith.constant 0 : index
    %c1152 = arith.constant 1152 : index
    %52 = vector.load %arg14[%c0_51, %c1152] : memref<2x2048xf32, #tpu.memory_space<vmem>>, vector<2x128xf32>
    tpu.vector_store %arg14[%c0_51, %c1152], %51 {strides = array<i32>} : memref<2x2048xf32, #tpu.memory_space<vmem>>, vector<2x128xf32>,
    %53 = vector.extract_strided_slice %32 {offsets = [20, 0], sizes = [2, 128], strides = [1, 1]} : vector<32x128xf32> to vector<2x128xf32>
    %c0_52 = arith.constant 0 : index
    %c1280 = arith.constant 1280 : index
    %54 = vector.load %arg14[%c0_52, %c1280] : memref<2x2048xf32, #tpu.memory_space<vmem>>, vector<2x128xf32>
    tpu.vector_store %arg14[%c0_52, %c1280], %53 {strides = array<i32>} : memref<2x2048xf32, #tpu.memory_space<vmem>>, vector<2x128xf32>,
    %55 = vector.extract_strided_slice %32 {offsets = [22, 0], sizes = [2, 128], strides = [1, 1]} : vector<32x128xf32> to vector<2x128xf32>
    %c0_53 = arith.constant 0 : index
    %c1408 = arith.constant 1408 : index
    %56 = vector.load %arg14[%c0_53, %c1408] : memref<2x2048xf32, #tpu.memory_space<vmem>>, vector<2x128xf32>
    tpu.vector_store %arg14[%c0_53, %c1408], %55 {strides = array<i32>} : memref<2x2048xf32, #tpu.memory_space<vmem>>, vector<2x128xf32>,
    %57 = vector.extract_strided_slice %32 {offsets = [24, 0], sizes = [2, 128], strides = [1, 1]} : vector<32x128xf32> to vector<2x128xf32>
    %c0_54 = arith.constant 0 : index
    %c1536 = arith.constant 1536 : index
    %58 = vector.load %arg14[%c0_54, %c1536] : memref<2x2048xf32, #tpu.memory_space<vmem>>, vector<2x128xf32>
    tpu.vector_store %arg14[%c0_54, %c1536], %57 {strides = array<i32>} : memref<2x2048xf32, #tpu.memory_space<vmem>>, vector<2x128xf32>,
    %59 = vector.extract_strided_slice %32 {offsets = [26, 0], sizes = [2, 128], strides = [1, 1]} : vector<32x128xf32> to vector<2x128xf32>
    %c0_55 = arith.constant 0 : index
    %c1664 = arith.constant 1664 : index
    %60 = vector.load %arg14[%c0_55, %c1664] : memref<2x2048xf32, #tpu.memory_space<vmem>>, vector<2x128xf32>
    tpu.vector_store %arg14[%c0_55, %c1664], %59 {strides = array<i32>} : memref<2x2048xf32, #tpu.memory_space<vmem>>, vector<2x128xf32>,
    %61 = vector.extract_strided_slice %32 {offsets = [28, 0], sizes = [2, 128], strides = [1, 1]} : vector<32x128xf32> to vector<2x128xf32>
    %c0_56 = arith.constant 0 : index
    %c1792 = arith.constant 1792 : index
    %62 = vector.load %arg14[%c0_56, %c1792] : memref<2x2048xf32, #tpu.memory_space<vmem>>, vector<2x128xf32>
    tpu.vector_store %arg14[%c0_56, %c1792], %61 {strides = array<i32>} : memref<2x2048xf32, #tpu.memory_space<vmem>>, vector<2x128xf32>,
    %63 = vector.extract_strided_slice %32 {offsets = [30, 0], sizes = [2, 128], strides = [1, 1]} : vector<32x128xf32> to vector<2x128xf32>
    %c0_57 = arith.constant 0 : index
    %c1920 = arith.constant 1920 : index
    %64 = vector.load %arg14[%c0_57, %c1920] : memref<2x2048xf32, #tpu.memory_space<vmem>>, vector<2x128xf32>
    tpu.vector_store %arg14[%c0_57, %c1920], %63 {strides = array<i32>} : memref<2x2048xf32, #tpu.memory_space<vmem>>, vector<2x128xf32>,
    %c0_58 = arith.constant 0 : index
    %c0_59 = arith.constant 0 : index
    %65 = vector.load %arg14[%c0_58, %c0_59] : memref<2x2048xf32, #tpu.memory_space<vmem>>, vector<2x2048xf32>
    %66 = arith.truncf %65 : vector<2x2048xf32> to vector<2x2048xbf16>
    %c0_60 = arith.constant 0 : index
    %c0_61 = arith.constant 0 : index
    %67 = vector.load %arg6[%c0_60, %c0_61] : memref<2048x32xbf16, #tpu.memory_space<vmem>>, vector<2048x32xbf16>
    %cst_62 = arith.constant dense<0.000000e+00> : vector<2x32xf32>
    %68 = tpu.matmul %66, %67, %cst_62 {dimension_numbers = #tpu.dot_dimension_numbers<[1], [0], [0], [1], [0, 0, 1, 1], [], []>} : vector<2x2048xbf16>, vector<2048x32xbf16>, vector<2x32xf32> -> vector<2x32xf32>
    %c0_63 = arith.constant 0 : index
    %c0_64 = arith.constant 0 : index
    %69 = vector.load %arg7[%c0_63, %c0_64] : memref<1x32xf32, #tpu.memory_space<vmem>>, vector<1x32xf32>
    %70 = vector.broadcast %69 : vector<1x32xf32> to vector<2x32xf32>
    %71 = arith.addf %68, %70 : vector<2x32xf32>
    %cst_65 = arith.constant 0.000000e+00 : f32
    %72 = vector.broadcast %cst_65 : f32 to vector<2x32xf32>
    %73 = arith.maximumf %71, %72 : vector<2x32xf32>
    %74 = arith.truncf %73 : vector<2x32xf32> to vector<2x32xbf16>
    %c0_66 = arith.constant 0 : index
    %c0_67 = arith.constant 0 : index
    %75 = vector.load %arg8[%c0_66, %c0_67] : memref<32x10xbf16, #tpu.memory_space<vmem>>, vector<32x10xbf16>
    %cst_68 = arith.constant dense<0.000000e+00> : vector<2x10xf32>
    %76 = tpu.matmul %74, %75, %cst_68 {dimension_numbers = #tpu.dot_dimension_numbers<[1], [0], [0], [1], [0, 0, 1, 1], [], []>} : vector<2x32xbf16>, vector<32x10xbf16>, vector<2x10xf32> -> vector<2x10xf32>
    %c0_69 = arith.constant 0 : index
    %c0_70 = arith.constant 0 : index
    %77 = vector.load %arg9[%c0_69, %c0_70] : memref<1x10xf32, #tpu.memory_space<vmem>>, vector<1x10xf32>
    %78 = vector.broadcast %77 : vector<1x10xf32> to vector<2x10xf32>
    %79 = arith.addf %76, %78 : vector<2x10xf32>
    %c0_71 = arith.constant 0 : index
    %c0_72 = arith.constant 0 : index
    %80 = vector.load %arg10[%c0_71, %c0_72] : memref<2x10xf32, #tpu.memory_space<vmem>>, vector<2x10xf32>
    tpu.vector_store %arg10[%c0_71, %c0_72], %79 {strides = array<i32>} : memref<2x10xf32, #tpu.memory_space<vmem>>, vector<2x10xf32>,
    return
  }
  func.func @transform_0(%arg0: i32) -> (i32, i32) {
    %c0_i32 = arith.constant 0 : i32
    %c0_i32_0 = arith.constant 0 : i32
    %c0_i32_1 = arith.constant 0 : i32
    return %c0_i32, %c0_i32_0 : i32, i32
  }
  func.func @transform_1(%arg0: i32) -> (i32, i32) {
    %c0_i32 = arith.constant 0 : i32
    %c0_i32_0 = arith.constant 0 : i32
    %c0_i32_1 = arith.constant 0 : i32
    return %c0_i32, %c0_i32_0 : i32, i32
  }
  func.func @transform_2(%arg0: i32) -> (i32, i32) {
    %c0_i32 = arith.constant 0 : i32
    %c0_i32_0 = arith.constant 0 : i32
    %c0_i32_1 = arith.constant 0 : i32
    return %c0_i32, %c0_i32_0 : i32, i32
  }
  func.func @transform_3(%arg0: i32) -> (i32, i32) {
    %c0_i32 = arith.constant 0 : i32
    %c0_i32_0 = arith.constant 0 : i32
    %c0_i32_1 = arith.constant 0 : i32
    return %c0_i32, %c0_i32_0 : i32, i32
  }
  func.func @transform_4(%arg0: i32) -> (i32, i32) {
    %c0_i32 = arith.constant 0 : i32
    %c0_i32_0 = arith.constant 0 : i32
    %c0_i32_1 = arith.constant 0 : i32
    return %c0_i32, %c0_i32_0 : i32, i32
  }
  func.func @transform_5(%arg0: i32) -> (i32, i32) {
    %c0_i32 = arith.constant 0 : i32
    %c0_i32_0 = arith.constant 0 : i32
    %c0_i32_1 = arith.constant 0 : i32
    return %c0_i32, %c0_i32_0 : i32, i32
  }
  func.func @transform_6(%arg0: i32) -> (i32, i32) {
    %c0_i32 = arith.constant 0 : i32
    %c0_i32_0 = arith.constant 0 : i32
    %c0_i32_1 = arith.constant 0 : i32
    return %c0_i32, %c0_i32_0 : i32, i32
  }
  func.func @transform_7(%arg0: i32) -> (i32, i32) {
    %c0_i32 = arith.constant 0 : i32
    %c0_i32_0 = arith.constant 0 : i32
    %c0_i32_1 = arith.constant 0 : i32
    return %c0_i32, %c0_i32_0 : i32, i32
  }
  func.func @transform_8(%arg0: i32) -> (i32, i32) {
    %c0_i32 = arith.constant 0 : i32
    %c0_i32_0 = arith.constant 0 : i32
    %c0_i32_1 = arith.constant 0 : i32
    return %c0_i32, %c0_i32_0 : i32, i32
  }
  func.func @transform_9(%arg0: i32) -> (i32, i32) {
    %c0_i32 = arith.constant 0 : i32
    %c0_i32_0 = arith.constant 0 : i32
    %c0_i32_1 = arith.constant 0 : i32
    return %c0_i32, %c0_i32_0 : i32, i32
  }
}

</mosaic_0001>

<llo_original>
// kernel: tile.10
$region0: #{tile.10}
  #allocation0 [shape = 's32[1]{0}', space=sflag, size = 0x4, scoped, tag = 'scoped memory for tile.10']
  %s0 = inlined_call_operand.vmem [shape: f32[8], index: 0, kind: input, shape index: {}]
  %s1 = inlined_call_operand.vmem [shape: f32[16,8], index: 1, kind: output, shape index: {}]
  // Predicated region
  $region2: #{tile.10} parent=0 // pred_check
    _
  $region3: #{tile.10} parent=0 // pred_check_branch
    %3 = sbr.rel (0) target = $region5
  $region4: #{tile.10} parent=0 // pred_region
    _
  $region5: #{tile.10} parent=0 // pred_fallthru
    _
  %v4 = vld [vmem:[%s0] ss:$0 sm:$0xff]
  %5 = vst [vmem:[%s1] sm:$0xff] %v4
  %s6 = scalar_lea.vmem %s1, 8
  %7 = vst [vmem:[%s6] sm:$0xff] %v4

// kernel: tile.11
$region0: #{tile.11}
  %s0 = inlined_call_operand.vmem [shape: f32[16,8], index: 0, kind: input, shape index: {}]
  %s1 = inlined_call_operand.vmem [shape: f32[1,128], index: 1, kind: output, shape index: {}]
  $region1: #{tile.11} parent=0
    #allocation0 [shape = 'u8[4096]{0}', space=vmem, size = 0x1000, scoped, tag = 'scoped mem for output reshape']
    %v2 = vld [vmem:[%s0] sm:$0x1]
    %vm3 = vcmask 64512
    %4 = vst.msk [vmem:[#allocation0] sm:$0x1] %vm3, %v2
    %s5 = scalar_lea.vmem %s0, 15
    %v6 = vld [vmem:[%s5] sm:$0x1]
    %7 = vrot.lane.b32.xlu0 %v6, 120
    %v8 = vpop.permute.xlu0 %7
    %vm9 = vcmask 1048512
    %10 = vst.msk [vmem:[#allocation0] sm:$0x1] %vm9, %v8
    %s11 = scalar_lea.vmem %s0, 14
    %v12 = vld [vmem:[%s11] sm:$0x1]
    %13 = vrot.lane.b32.xlu0 %v12, 112
    %v14 = vpop.permute.xlu0 %13
    %vm15 = vcmask 982912
    %16 = vst.msk [vmem:[#allocation0] sm:$0x1] %vm15, %v14
    %s17 = scalar_lea.vmem %s0, 13
    %v18 = vld [vmem:[%s17] sm:$0x1]
    %19 = vrot.lane.b32.xlu0 %v18, 104
    %v20 = vpop.permute.xlu0 %19
    %vm21 = vcmask 917312
    %22 = vst.msk [vmem:[#allocation0] sm:$0x1] %vm21, %v20
    %s23 = scalar_lea.vmem %s0, 12
    %v24 = vld [vmem:[%s23] sm:$0x1]
    %25 = vrot.lane.b32.xlu0 %v24, 96
    %v26 = vpop.permute.xlu0 %25
    %vm27 = vcmask 851712
    %28 = vst.msk [vmem:[#allocation0] sm:$0x1] %vm27, %v26
    %s29 = scalar_lea.vmem %s0, 11
    %v30 = vld [vmem:[%s29] sm:$0x1]
    %31 = vrot.lane.b32.xlu0 %v30, 88
    %v32 = vpop.permute.xlu0 %31
    %vm33 = vcmask 786112
    %34 = vst.msk [vmem:[#allocation0] sm:$0x1] %vm33, %v32
    %s35 = scalar_lea.vmem %s0, 10
    %v36 = vld [vmem:[%s35] sm:$0x1]
    %37 = vrot.lane.b32.xlu0 %v36, 80
    %v38 = vpop.permute.xlu0 %37
    %vm39 = vcmask 720512
    %40 = vst.msk [vmem:[#allocation0] sm:$0x1] %vm39, %v38
    %s41 = scalar_lea.vmem %s0, 9
    %v42 = vld [vmem:[%s41] sm:$0x1]
    %43 = vrot.lane.b32.xlu0 %v42, 72
    %v44 = vpop.permute.xlu0 %43
    %vm45 = vcmask 654912
    %46 = vst.msk [vmem:[#allocation0] sm:$0x1] %vm45, %v44
    %s47 = scalar_lea.vmem %s0, 8
    %v48 = vld [vmem:[%s47] sm:$0x1]
    %49 = vrot.lane.b32.xlu0 %v48, 64
    %v50 = vpop.permute.xlu0 %49
    %vm51 = vcmask 589312
    %52 = vst.msk [vmem:[#allocation0] sm:$0x1] %vm51, %v50
    %s53 = scalar_lea.vmem %s0, 7
    %v54 = vld [vmem:[%s53] sm:$0x1]
    %55 = vrot.lane.b32.xlu0 %v54, 56
    %v56 = vpop.permute.xlu0 %55
    %vm57 = vcmask 523712
    %58 = vst.msk [vmem:[#allocation0] sm:$0x1] %vm57, %v56
    %s59 = scalar_lea.vmem %s0, 6
    %v60 = vld [vmem:[%s59] sm:$0x1]
    %61 = vrot.lane.b32.xlu0 %v60, 48
    %v62 = vpop.permute.xlu0 %61
    %vm63 = vcmask 458112
    %64 = vst.msk [vmem:[#allocation0] sm:$0x1] %vm63, %v62
    %s65 = scalar_lea.vmem %s0, 5
    %v66 = vld [vmem:[%s65] sm:$0x1]
    %67 = vrot.lane.b32.xlu0 %v66, 40
    %v68 = vpop.permute.xlu0 %67
    %vm69 = vcmask 392512
    %70 = vst.msk [vmem:[#allocation0] sm:$0x1] %vm69, %v68
    %s71 = scalar_lea.vmem %s0, 4
    %v72 = vld [vmem:[%s71] sm:$0x1]
    %73 = vrot.lane.b32.xlu0 %v72, 32
    %v74 = vpop.permute.xlu0 %73
    %vm75 = vcmask 326912
    %76 = vst.msk [vmem:[#allocation0] sm:$0x1] %vm75, %v74
    %s77 = scalar_lea.vmem %s0, 3
    %v78 = vld [vmem:[%s77] sm:$0x1]
    %79 = vrot.lane.b32.xlu0 %v78, 24
    %v80 = vpop.permute.xlu0 %79
    %vm81 = vcmask 261312
    %82 = vst.msk [vmem:[#allocation0] sm:$0x1] %vm81, %v80
    %s83 = scalar_lea.vmem %s0, 2
    %v84 = vld [vmem:[%s83] sm:$0x1]
    %85 = vrot.lane.b32.xlu0 %v84, 16
    %v86 = vpop.permute.xlu0 %85
    %vm87 = vcmask 195712
    %88 = vst.msk [vmem:[#allocation0] sm:$0x1] %vm87, %v86
    %s89 = scalar_lea.vmem %s0, 1
    %v90 = vld [vmem:[%s89] sm:$0x1]
    %91 = vrot.lane.b32.xlu0 %v90, 8
    %v92 = vpop.permute.xlu0 %91
    %vm93 = vcmask 130112
    %94 = vst.msk [vmem:[#allocation0] sm:$0x1] %vm93, %v92
    %s96 = sshllo.u32 0, 1
    %v98 = vld [vmem:[#allocation0] sm:%s96]
    %s99 = sshllo.u32 0, 1
    %100 = vst [vmem:[%s1] sm:%s99] %v98

// kernel: _lambda_.1
$region0: #{_lambda_.1}
  #allocation0 [shape = 'u32[]', space=smem, size = 0x4, offset = 0x4, fixed_abs, tag = 'smem constant byte address 0x4 - core index']
  #allocation1 [shape = 'u32[144,128]{1,0:T(1,128)}', space=vmem, size = 0x12000, scoped, tag = 'internal scratch']
  #allocation2 [shape = 'f32[32,192]{1,0:T(8,128)}', space=vmem, size = 0x8000, scoped, tag = 'scratch operand']
  #allocation3 [shape = 'f32[32,384]{1,0:T(8,128)}', space=vmem, size = 0xc000, scoped, tag = 'scratch operand']
  #allocation4 [shape = 'f32[36,128]{1,0:T(8,128)}', space=vmem, size = 0x5000, scoped, tag = 'scratch operand']
  #allocation5 [shape = 'f32[2,2048]{1,0:T(2,128)}', space=vmem, size = 0x4000, scoped, tag = 'scratch operand']
  %s0 = inlined_call_operand.vmem [shape: f32[36,64], index: 0, kind: input, shape index: {}]
  %s1 = inlined_call_operand.vmem [shape: bf16[192,128], index: 1, kind: input, shape index: {}]
  %s2 = inlined_call_operand.vmem [shape: f32[1,128], index: 2, kind: input, shape index: {}]
  %s3 = inlined_call_operand.vmem [shape: bf16[384,128], index: 3, kind: input, shape index: {}]
  %s4 = inlined_call_operand.vmem [shape: f32[1,128], index: 4, kind: input, shape index: {}]
  %s5 = inlined_call_operand.vmem [shape: bf16[2048,32], index: 5, kind: input, shape index: {}]
  %s6 = inlined_call_operand.vmem [shape: f32[1,32], index: 6, kind: input, shape index: {}]
  %s7 = inlined_call_operand.vmem [shape: bf16[32,10], index: 7, kind: input, shape index: {}]
  %s8 = inlined_call_operand.vmem [shape: f32[1,10], index: 8, kind: input, shape index: {}]
  %s9 = inlined_call_operand.hbm [shape: f32[2,10], index: 9, kind: output, shape index: {}]
  %s10 = sld [smem:[#allocation0]]
  $region46: #{_lambda_.1} parent=0
    _
  %s12 = ssub.s32 1, %s10
  %s13 = scalar_select 0, %s12, %s10
  $region1: #{_lambda_.1} parent=0
    #allocation6 [shape = 'u8[1024]{0}', space=vmem, size = 0x400, scoped, tag = 'output window, operand 0, single buffered']
    #allocation7 [shape = 's32[1]{0}', space=sflag, size = 0x4, scoped, tag = 'scoped memory for _lambda_.1']
    %14 = vsyncpa [#allocation7], 0
    // Predicated region
    $region2: #{_lambda_.1} parent=1 // pred_check
      _
    $region3: #{_lambda_.1} parent=1 // pred_check_branch
      %16 = sbr.rel (0) target = $region5
    $region4: #{_lambda_.1} parent=1 // pred_region
      _
    $region5: #{_lambda_.1} parent=1 // pred_fallthru
      _
    // Predicated region
    $region6: #{_lambda_.1} parent=1 // pred_check
      _
    $region7: #{_lambda_.1} parent=1 // pred_check_branch
      %18 = sbr.rel (0) target = $region9
    $region8: #{_lambda_.1} parent=1 // pred_region
      _
    $region9: #{_lambda_.1} parent=1 // pred_fallthru
      _
    // Predicated region
    $region10: #{_lambda_.1} parent=1 // pred_check
      _
    $region11: #{_lambda_.1} parent=1 // pred_check_branch
      %20 = sbr.rel (0) target = $region13
    $region12: #{_lambda_.1} parent=1 // pred_region
      _
    $region13: #{_lambda_.1} parent=1 // pred_fallthru
      _
    // Predicated region
    $region14: #{_lambda_.1} parent=1 // pred_check
      _
    $region15: #{_lambda_.1} parent=1 // pred_check_branch
      %22 = sbr.rel (0) target = $region17
    $region16: #{_lambda_.1} parent=1 // pred_region
      _
    $region17: #{_lambda_.1} parent=1 // pred_fallthru
      _
    // Predicated region
    $region18: #{_lambda_.1} parent=1 // pred_check
      _
    $region19: #{_lambda_.1} parent=1 // pred_check_branch
      %24 = sbr.rel (0) target = $region21
    $region20: #{_lambda_.1} parent=1 // pred_region
      _
    $region21: #{_lambda_.1} parent=1 // pred_fallthru
      _
    // Predicated region
    $region22: #{_lambda_.1} parent=1 // pred_check
      _
    $region23: #{_lambda_.1} parent=1 // pred_check_branch
      %26 = sbr.rel (0) target = $region25
    $region24: #{_lambda_.1} parent=1 // pred_region
      _
    $region25: #{_lambda_.1} parent=1 // pred_fallthru
      _
    // Predicated region
    $region26: #{_lambda_.1} parent=1 // pred_check
      _
    $region27: #{_lambda_.1} parent=1 // pred_check_branch
      %28 = sbr.rel (0) target = $region29
    $region28: #{_lambda_.1} parent=1 // pred_region
      _
    $region29: #{_lambda_.1} parent=1 // pred_fallthru
      _
    // Predicated region
    $region30: #{_lambda_.1} parent=1 // pred_check
      _
    $region31: #{_lambda_.1} parent=1 // pred_check_branch
      %30 = sbr.rel (0) target = $region33
    $region32: #{_lambda_.1} parent=1 // pred_region
      _
    $region33: #{_lambda_.1} parent=1 // pred_fallthru
      _
    // Predicated region
    $region34: #{_lambda_.1} parent=1 // pred_check
      _
    $region35: #{_lambda_.1} parent=1 // pred_check_branch
      %32 = sbr.rel (0) target = $region37
    $region36: #{_lambda_.1} parent=1 // pred_region
      _
    $region37: #{_lambda_.1} parent=1 // pred_fallthru
      _
    %34 = vst [vmem:[#allocation4] sm:$0x3] 0.0
    %35 = vst [vmem:[#allocation4 + $0x22] sm:$0x3] 0.0
    %v36 = vld [vmem:[%s0] sm:$0xff]
    %v37 = vld [vmem:[%s0 + $0x8] sm:$0xff]
    %v38 = vld [vmem:[%s0 + $0x10] sm:$0xff]
    %v39 = vld [vmem:[%s0 + $0x18] sm:$0xff]
    %vm40 = vcmask 523264
    %41 = vst.msk [vmem:[#allocation2] sm:$0xff] %vm40, %v36
    %42 = vst.msk [vmem:[#allocation2 + $0x10] sm:$0xff] %vm40, %v37
    %43 = vst.msk [vmem:[#allocation2 + $0x20] sm:$0xff] %vm40, %v38
    %44 = vst.msk [vmem:[#allocation2 + $0x30] sm:$0xff] %vm40, %v39
    %v45 = vld [vmem:[%s0 + $0x2] sm:$0xff]
    %v46 = vld [vmem:[%s0 + $0xa] sm:$0xff]
    %v47 = vld [vmem:[%s0 + $0x12] sm:$0xff]
    %v48 = vld [vmem:[%s0 + $0x1a] sm:$0xff]
    %53 = vrot.lane.b32.xlu0 %v45, 64
    %v54 = vpop.permute.xlu0 %53
    %55 = vrot.lane.b32.xlu0 %v46, 64
    %v56 = vpop.permute.xlu0 %55
    %57 = vrot.lane.b32.xlu0 %v47, 64
    %v58 = vpop.permute.xlu0 %57
    %59 = vrot.lane.b32.xlu0 %v48, 64
    %v60 = vpop.permute.xlu0 %59
    %vm65 = vcmask 1048064
    %66 = vst.msk [vmem:[#allocation2] sm:$0xff] %vm65, %v54
    %67 = vst.msk [vmem:[#allocation2 + $0x10] sm:$0xff] %vm65, %v56
    %68 = vst.msk [vmem:[#allocation2 + $0x20] sm:$0xff] %vm65, %v58
    %69 = vst.msk [vmem:[#allocation2 + $0x30] sm:$0xff] %vm65, %v60
    %v70 = vld [vmem:[%s0 + $0x4] sm:$0xff]
    %v71 = vld [vmem:[%s0 + $0xc] sm:$0xff]
    %v72 = vld [vmem:[%s0 + $0x14] sm:$0xff]
    %v73 = vld [vmem:[%s0 + $0x1c] sm:$0xff]
    %74 = vst.msk [vmem:[#allocation2 + $0x8] sm:$0xff] %vm40, %v70
    %75 = vst.msk [vmem:[#allocation2 + $0x18] sm:$0xff] %vm40, %v71
    %76 = vst.msk [vmem:[#allocation2 + $0x28] sm:$0xff] %vm40, %v72
    %77 = vst.msk [vmem:[#allocation2 + $0x38] sm:$0xff] %vm40, %v73
    %v78 = vld [vmem:[#allocation2] sm:$0xff]
    %v79 = vld [vmem:[#allocation2 + $0x8] sm:$0xff]
    %v80 = vld [vmem:[#allocation2 + $0x10] sm:$0xff]
    %v81 = vld [vmem:[#allocation2 + $0x18] sm:$0xff]
    %v82 = vld [vmem:[#allocation2 + $0x20] sm:$0xff]
    %v83 = vld [vmem:[#allocation2 + $0x28] sm:$0xff]
    %v84 = vld [vmem:[#allocation2 + $0x30] sm:$0xff]
    %v85 = vld [vmem:[#allocation2 + $0x38] sm:$0xff]
    %v86 = vpack.c.bf16 %v80, %v78
    %v87 = vpack.c.bf16 %v81, %v79
    %v88 = vpack.c.bf16 %v84, %v82
    %v89 = vpack.c.bf16 %v85, %v83
    %v90 = vld [vmem:[%s1] sm:$0xf]
    %v91 = vld [vmem:[%s1 + $0x4] sm:$0xf]
    %v92 = vld [vmem:[%s1 + $0x8] sm:$0xf]
    %v93 = vld [vmem:[%s1 + $0xc] sm:$0xf]
    %v94 = vld [vmem:[%s1 + $0x10] sm:$0xf]
    %v95 = vld [vmem:[%s1 + $0x14] sm:$0xf]
    %v96 = vld [vmem:[%s1 + $0x18] sm:$0xf]
    %v97 = vld [vmem:[%s1 + $0x1c] sm:$0xf]
    %v98 = vld [vmem:[%s1 + $0x20] sm:$0xf]
    %v99 = vld [vmem:[%s1 + $0x24] sm:$0xf]
    %v100 = vld [vmem:[%s1 + $0x28] sm:$0xf]
    %v101 = vld [vmem:[%s1 + $0x2c] sm:$0xf]
    %v102 = vld [vmem:[%s1 + $0x30] sm:$0xf]
    %v103 = vld [vmem:[%s1 + $0x34] sm:$0xf]
    %v104 = vld [vmem:[%s1 + $0x38] sm:$0xf]
    %v105 = vld [vmem:[%s1 + $0x3c] sm:$0xf]
    %v106 = vld [vmem:[%s1 + $0x40] sm:$0xf]
    %v107 = vld [vmem:[%s1 + $0x44] sm:$0xf]
    %v108 = vld [vmem:[%s1 + $0x48] sm:$0xf]
    %v109 = vld [vmem:[%s1 + $0x4c] sm:$0xf]
    %v110 = vld [vmem:[%s1 + $0x50] sm:$0xf]
    %v111 = vld [vmem:[%s1 + $0x54] sm:$0xf]
    %v112 = vld [vmem:[%s1 + $0x58] sm:$0xf]
    %v113 = vld [vmem:[%s1 + $0x5c] sm:$0xf]
    %v114 = vld [vmem:[%s2] sm:$0x1]
    %v116 = vlaneseq
    %v117 = vshrl.u32 %v116, 7
    %v118 = vsub.s32 0, %v117
    %v119 = vrot.slane %v114, %v118
    %v145 = vunpack.c.l.b16 %v90
    %v146 = vunpack.c.l.b16 %v91
    %v147 = vunpack.c.l.b16 %v92
    %v148 = vunpack.c.l.b16 %v93
    %v149 = vunpack.c.l.b16 %v94
    %v150 = vunpack.c.l.b16 %v95
    %v151 = vunpack.c.l.b16 %v96
    %v152 = vunpack.c.l.b16 %v97
    %v153 = vunpack.c.l.b16 %v98
    %v154 = vunpack.c.l.b16 %v99
    %v155 = vunpack.c.l.b16 %v100
    %v156 = vunpack.c.l.b16 %v101
    %v157 = vunpack.c.l.b16 %v102
    %v158 = vunpack.c.l.b16 %v103
    %v159 = vunpack.c.l.b16 %v104
    %v160 = vunpack.c.l.b16 %v105
    %v161 = vunpack.c.l.b16 %v106
    %v162 = vunpack.c.l.b16 %v107
    %v163 = vunpack.c.l.b16 %v108
    %v164 = vunpack.c.l.b16 %v109
    %v165 = vunpack.c.l.b16 %v110
    %v166 = vunpack.c.l.b16 %v111
    %v167 = vunpack.c.l.b16 %v112
    %v168 = vunpack.c.l.b16 %v113
    %v169 = vpack.c.b16 %v146, %v145
    %v170 = vpack.c.b16 %v148, %v147
    %v171 = vpack.c.b16 %v150, %v149
    %v172 = vpack.c.b16 %v152, %v151
    %v173 = vpack.c.b16 %v154, %v153
    %v174 = vpack.c.b16 %v156, %v155
    %v175 = vpack.c.b16 %v158, %v157
    %v176 = vpack.c.b16 %v160, %v159
    %v177 = vpack.c.b16 %v162, %v161
    %v178 = vpack.c.b16 %v164, %v163
    %v179 = vpack.c.b16 %v166, %v165
    %v180 = vpack.c.b16 %v168, %v167
    %v194 = vsel %vm40, %v87, 0
    %v197 = vsel %vm40, %v89, 0
    %199 = vmatprep.subr.bf16.mxu0 0
    %200 = vmatpush1.bf16.msra.mxu0 %v169
    %201 = vmatprep.subr.bf16.mxu0 0
    %202 = vmatpush1.bf16.msra.mxu0 %v170
    %203 = vmatprep.subr.bf16.mxu0 0
    %204 = vmatpush1.bf16.msra.mxu0 %v171
    %205 = vmatprep.subr.bf16.mxu0 0
    %206 = vmatpush1.bf16.msra.mxu0 %v172
    %207 = vmatprep.subr.bf16.mxu0 0
    %208 = vmatpush1.bf16.msra.mxu0 %v173
    %209 = vmatprep.subr.bf16.mxu0 0
    %210 = vmatpush1.bf16.msra.mxu0 %v174
    %211 = vmatprep.subr.bf16.mxu0 0
    %212 = vmatpush1.bf16.msra.mxu0 %v175
    %213 = vmatprep.subr.bf16.mxu0 0
    %214 = vmatpush1.bf16.msra.mxu0 %v176
    %215 = vmatprep.subr.bf16.mxu0 0
    %216 = vmatpush1.bf16.msra.mxu0 %v177
    %217 = vmatprep.subr.bf16.mxu0 0
    %218 = vmatpush1.bf16.msra.mxu0 %v178
    %219 = vmatprep.subr.bf16.mxu0 0
    %220 = vmatpush1.bf16.msra.mxu0 %v179
    %221 = vmatprep.subr.bf16.mxu0 0
    %222 = vmatpush1.bf16.msra.mxu0 %v180
    %223 = vmatprep.subr.bf16.mxu0 0
    %224 = vmatpush1.bf16.msra.mxu0 0
    %225 = vmatprep.subr.bf16.mxu0 0
    %226 = vmatpush1.bf16.msra.mxu0 0
    %227 = vmatprep.subr.bf16.mxu0 0
    %228 = vmatpush1.bf16.msra.mxu0 0
    %229 = vmatprep.subr.bf16.mxu0 0
    %230 = vmatpush1.bf16.msra.mxu0 0
    %231 = vmatprep.mubr.bf16.mxu0 %v194
    %232 = vmatmul.mubr.bf16.gmra.mrb[0].mxu0 %v86
    %v233 = vpop.f32.mrb[0].mxu0
    %v234 = vadd.f32 %v119, %v233
    %v235 = vpop.f32.mrb[0].mxu0
    %v236 = vpop.f32.mrb[0].mxu0
    %v237 = vadd.f32 %v119, %v236
    %v238 = vpop.f32.mrb[0].mxu0
    %239 = vmatprep.mubr.bf16.mxu0 %v197
    %240 = vmatmul.mubr.bf16.gmra.mrb[0].mxu0 %v88
    %v241 = vpop.f32.mrb[0].mxu0
    %v242 = vadd.f32 %v119, %v241
    %v243 = vpop.f32.mrb[0].mxu0
    %v244 = vpop.f32.mrb[0].mxu0
    %v245 = vadd.f32 %v119, %v244
    %v246 = vpop.f32.mrb[0].mxu0
    %247 = vdwg.mxu0
    %v248 = vmax.f32 %v234, 0.0
    %v249 = vmax.f32 %v237, 0.0
    %v250 = vmax.f32 %v242, 0.0
    %v251 = vmax.f32 %v245, 0.0
    %252 = vst [vmem:[#allocation4 + $0x2] sm:$0xff] %v248
    %253 = vst [vmem:[#allocation4 + $0xa] sm:$0xff] %v249
    %254 = vst [vmem:[#allocation4 + $0x12] sm:$0xff] %v250
    %255 = vst [vmem:[#allocation4 + $0x1a] sm:$0xff] %v251
    %v256 = vld [vmem:[#allocation4] sm:$0xff]
    %v257 = vld [vmem:[#allocation4 + $0x8] sm:$0xff]
    %v258 = vld [vmem:[#allocation4 + $0x10] sm:$0xff]
    %v259 = vld [vmem:[#allocation4 + $0x18] sm:$0xff]
    %260 = vst [vmem:[#allocation3] sm:$0xff] %v256
    %261 = vst [vmem:[#allocation3 + $0x18] sm:$0xff] %v257
    %262 = vst [vmem:[#allocation3 + $0x30] sm:$0xff] %v258
    %263 = vst [vmem:[#allocation3 + $0x48] sm:$0xff] %v259
    %v264 = vld [vmem:[#allocation4 + $0x2] sm:$0xff]
    %v265 = vld [vmem:[#allocation4 + $0xa] sm:$0xff]
    %v266 = vld [vmem:[#allocation4 + $0x12] sm:$0xff]
    %v267 = vld [vmem:[#allocation4 + $0x1a] sm:$0xff]
    %268 = vst [vmem:[#allocation3 + $0x8] sm:$0xff] %v264
    %269 = vst [vmem:[#allocation3 + $0x20] sm:$0xff] %v265
    %270 = vst [vmem:[#allocation3 + $0x38] sm:$0xff] %v266
    %271 = vst [vmem:[#allocation3 + $0x50] sm:$0xff] %v267
    %v272 = vld [vmem:[#allocation4 + $0x4] sm:$0xff]
    %v273 = vld [vmem:[#allocation4 + $0xc] sm:$0xff]
    %v274 = vld [vmem:[#allocation4 + $0x14] sm:$0xff]
    %v275 = vld [vmem:[#allocation4 + $0x1c] sm:$0xff]
    %276 = vst [vmem:[#allocation3 + $0x10] sm:$0xff] %v272
    %277 = vst [vmem:[#allocation3 + $0x28] sm:$0xff] %v273
    %278 = vst [vmem:[#allocation3 + $0x40] sm:$0xff] %v274
    %279 = vst [vmem:[#allocation3 + $0x58] sm:$0xff] %v275
    %v280 = vld [vmem:[#allocation3] sm:$0xff]
    %v281 = vld [vmem:[#allocation3 + $0x8] sm:$0xff]
    %v282 = vld [vmem:[#allocation3 + $0x10] sm:$0xff]
    %v283 = vld [vmem:[#allocation3 + $0x18] sm:$0xff]
    %v284 = vld [vmem:[#allocation3 + $0x20] sm:$0xff]
    %v285 = vld [vmem:[#allocation3 + $0x28] sm:$0xff]
    %v286 = vld [vmem:[#allocation3 + $0x30] sm:$0xff]
    %v287 = vld [vmem:[#allocation3 + $0x38] sm:$0xff]
    %v288 = vld [vmem:[#allocation3 + $0x40] sm:$0xff]
    %v289 = vld [vmem:[#allocation3 + $0x48] sm:$0xff]
    %v290 = vld [vmem:[#allocation3 + $0x50] sm:$0xff]
    %v291 = vld [vmem:[#allocation3 + $0x58] sm:$0xff]
    %v292 = vpack.c.bf16 %v283, %v280
    %v293 = vpack.c.bf16 %v284, %v281
    %v294 = vpack.c.bf16 %v285, %v282
    %v295 = vpack.c.bf16 %v289, %v286
    %v296 = vpack.c.bf16 %v290, %v287
    %v297 = vpack.c.bf16 %v291, %v288
    %v298 = vld [vmem:[%s3] sm:$0xf]
    %v299 = vld [vmem:[%s3 + $0x4] sm:$0xf]
    %v300 = vld [vmem:[%s3 + $0x8] sm:$0xf]
    %v301 = vld [vmem:[%s3 + $0xc] sm:$0xf]
    %v302 = vld [vmem:[%s3 + $0x10] sm:$0xf]
    %v303 = vld [vmem:[%s3 + $0x14] sm:$0xf]
    %v304 = vld [vmem:[%s3 + $0x18] sm:$0xf]
    %v305 = vld [vmem:[%s3 + $0x1c] sm:$0xf]
    %v306 = vld [vmem:[%s3 + $0x20] sm:$0xf]
    %v307 = vld [vmem:[%s3 + $0x24] sm:$0xf]
    %v308 = vld [vmem:[%s3 + $0x28] sm:$0xf]
    %v309 = vld [vmem:[%s3 + $0x2c] sm:$0xf]
    %v310 = vld [vmem:[%s3 + $0x30] sm:$0xf]
    %v311 = vld [vmem:[%s3 + $0x34] sm:$0xf]
    %v312 = vld [vmem:[%s3 + $0x38] sm:$0xf]
    %v313 = vld [vmem:[%s3 + $0x3c] sm:$0xf]
    %v314 = vld [vmem:[%s3 + $0x40] sm:$0xf]
    %v315 = vld [vmem:[%s3 + $0x44] sm:$0xf]
    %v316 = vld [vmem:[%s3 + $0x48] sm:$0xf]
    %v317 = vld [vmem:[%s3 + $0x4c] sm:$0xf]
    %v318 = vld [vmem:[%s3 + $0x50] sm:$0xf]
    %v319 = vld [vmem:[%s3 + $0x54] sm:$0xf]
    %v320 = vld [vmem:[%s3 + $0x58] sm:$0xf]
    %v321 = vld [vmem:[%s3 + $0x5c] sm:$0xf]
    %v322 = vld [vmem:[%s3 + $0x60] sm:$0xf]
    %v323 = vld [vmem:[%s3 + $0x64] sm:$0xf]
    %v324 = vld [vmem:[%s3 + $0x68] sm:$0xf]
    %v325 = vld [vmem:[%s3 + $0x6c] sm:$0xf]
    %v326 = vld [vmem:[%s3 + $0x70] sm:$0xf]
    %v327 = vld [vmem:[%s3 + $0x74] sm:$0xf]
    %v328 = vld [vmem:[%s3 + $0x78] sm:$0xf]
    %v329 = vld [vmem:[%s3 + $0x7c] sm:$0xf]
    %v330 = vld [vmem:[%s3 + $0x80] sm:$0xf]
    %v331 = vld [vmem:[%s3 + $0x84] sm:$0xf]
    %v332 = vld [vmem:[%s3 + $0x88] sm:$0xf]
    %v333 = vld [vmem:[%s3 + $0x8c] sm:$0xf]
    %v334 = vld [vmem:[%s3 + $0x90] sm:$0xf]
    %v335 = vld [vmem:[%s3 + $0x94] sm:$0xf]
    %v336 = vld [vmem:[%s3 + $0x98] sm:$0xf]
    %v337 = vld [vmem:[%s3 + $0x9c] sm:$0xf]
    %v338 = vld [vmem:[%s3 + $0xa0] sm:$0xf]
    %v339 = vld [vmem:[%s3 + $0xa4] sm:$0xf]
    %v340 = vld [vmem:[%s3 + $0xa8] sm:$0xf]
    %v341 = vld [vmem:[%s3 + $0xac] sm:$0xf]
    %v342 = vld [vmem:[%s3 + $0xb0] sm:$0xf]
    %v343 = vld [vmem:[%s3 + $0xb4] sm:$0xf]
    %v344 = vld [vmem:[%s3 + $0xb8] sm:$0xf]
    %v345 = vld [vmem:[%s3 + $0xbc] sm:$0xf]
    %v346 = vld [vmem:[%s4] sm:$0x1]
    %v348 = vlaneseq
    %v349 = vshrl.u32 %v348, 7
    %v350 = vsub.s32 0, %v349
    %v351 = vrot.slane %v346, %v350
    %v401 = vunpack.c.l.b16 %v298
    %v402 = vunpack.c.l.b16 %v299
    %v403 = vunpack.c.l.b16 %v300
    %v404 = vunpack.c.l.b16 %v301
    %v405 = vunpack.c.l.b16 %v302
    %v406 = vunpack.c.l.b16 %v303
    %v407 = vunpack.c.l.b16 %v304
    %v408 = vunpack.c.l.b16 %v305
    %v409 = vunpack.c.l.b16 %v306
    %v410 = vunpack.c.l.b16 %v307
    %v411 = vunpack.c.l.b16 %v308
    %v412 = vunpack.c.l.b16 %v309
    %v413 = vunpack.c.l.b16 %v310
    %v414 = vunpack.c.l.b16 %v311
    %v415 = vunpack.c.l.b16 %v312
    %v416 = vunpack.c.l.b16 %v313
    %v417 = vunpack.c.l.b16 %v314
    %v418 = vunpack.c.l.b16 %v315
    %v419 = vunpack.c.l.b16 %v316
    %v420 = vunpack.c.l.b16 %v317
    %v421 = vunpack.c.l.b16 %v318
    %v422 = vunpack.c.l.b16 %v319
    %v423 = vunpack.c.l.b16 %v320
    %v424 = vunpack.c.l.b16 %v321
    %v425 = vunpack.c.l.b16 %v322
    %v426 = vunpack.c.l.b16 %v323
    %v427 = vunpack.c.l.b16 %v324
    %v428 = vunpack.c.l.b16 %v325
    %v429 = vunpack.c.l.b16 %v326
    %v430 = vunpack.c.l.b16 %v327
    %v431 = vunpack.c.l.b16 %v328
    %v432 = vunpack.c.l.b16 %v329
    %v433 = vunpack.c.l.b16 %v330
    %v434 = vunpack.c.l.b16 %v331
    %v435 = vunpack.c.l.b16 %v332
    %v436 = vunpack.c.l.b16 %v333
    %v437 = vunpack.c.l.b16 %v334
    %v438 = vunpack.c.l.b16 %v335
    %v439 = vunpack.c.l.b16 %v336
    %v440 = vunpack.c.l.b16 %v337
    %v441 = vunpack.c.l.b16 %v338
    %v442 = vunpack.c.l.b16 %v339
    %v443 = vunpack.c.l.b16 %v340
    %v444 = vunpack.c.l.b16 %v341
    %v445 = vunpack.c.l.b16 %v342
    %v446 = vunpack.c.l.b16 %v343
    %v447 = vunpack.c.l.b16 %v344
    %v448 = vunpack.c.l.b16 %v345
    %v449 = vpack.c.b16 %v402, %v401
    %v450 = vpack.c.b16 %v404, %v403
    %v451 = vpack.c.b16 %v406, %v405
    %v452 = vpack.c.b16 %v408, %v407
    %v453 = vpack.c.b16 %v410, %v409
    %v454 = vpack.c.b16 %v412, %v411
    %v455 = vpack.c.b16 %v414, %v413
    %v456 = vpack.c.b16 %v416, %v415
    %v457 = vpack.c.b16 %v418, %v417
    %v458 = vpack.c.b16 %v420, %v419
    %v459 = vpack.c.b16 %v422, %v421
    %v460 = vpack.c.b16 %v424, %v423
    %v461 = vpack.c.b16 %v426, %v425
    %v462 = vpack.c.b16 %v428, %v427
    %v463 = vpack.c.b16 %v430, %v429
    %v464 = vpack.c.b16 %v432, %v431
    %v465 = vpack.c.b16 %v434, %v433
    %v466 = vpack.c.b16 %v436, %v435
    %v467 = vpack.c.b16 %v438, %v437
    %v468 = vpack.c.b16 %v440, %v439
    %v469 = vpack.c.b16 %v442, %v441
    %v470 = vpack.c.b16 %v444, %v443
    %v471 = vpack.c.b16 %v446, %v445
    %v472 = vpack.c.b16 %v448, %v447
    %497 = vmatprep.subr.bf16.mxu0 0
    %498 = vmatpush1.bf16.msra.mxu0 %v449
    %499 = vmatprep.subr.bf16.mxu0 0
    %500 = vmatpush1.bf16.msra.mxu0 %v450
    %501 = vmatprep.subr.bf16.mxu0 0
    %502 = vmatpush1.bf16.msra.mxu0 %v451
    %503 = vmatprep.subr.bf16.mxu0 0
    %504 = vmatpush1.bf16.msra.mxu0 %v452
    %505 = vmatprep.subr.bf16.mxu0 0
    %506 = vmatpush1.bf16.msra.mxu0 %v453
    %507 = vmatprep.subr.bf16.mxu0 0
    %508 = vmatpush1.bf16.msra.mxu0 %v454
    %509 = vmatprep.subr.bf16.mxu0 0
    %510 = vmatpush1.bf16.msra.mxu0 %v455
    %511 = vmatprep.subr.bf16.mxu0 0
    %512 = vmatpush1.bf16.msra.mxu0 %v456
    %513 = vmatprep.subr.bf16.mxu0 0
    %514 = vmatpush1.bf16.msra.mxu0 %v457
    %515 = vmatprep.subr.bf16.mxu0 0
    %516 = vmatpush1.bf16.msra.mxu0 %v458
    %517 = vmatprep.subr.bf16.mxu0 0
    %518 = vmatpush1.bf16.msra.mxu0 %v459
    %519 = vmatprep.subr.bf16.mxu0 0
    %520 = vmatpush1.bf16.msra.mxu0 %v460
    %521 = vmatprep.subr.bf16.mxu0 0
    %522 = vmatpush1.bf16.msra.mxu0 %v461
    %523 = vmatprep.subr.bf16.mxu0 0
    %524 = vmatpush1.bf16.msra.mxu0 %v462
    %525 = vmatprep.subr.bf16.mxu0 0
    %526 = vmatpush1.bf16.msra.mxu0 %v463
    %527 = vmatprep.subr.bf16.mxu0 0
    %528 = vmatpush1.bf16.msra.mxu0 %v464
    %529 = vmatprep.mubr.bf16.mxu0 %v293
    %530 = vmatmul.mubr.bf16.gmra.mrb[0].mxu0 %v292
    %v531 = vpop.f32.mrb[0].mxu0
    %v532 = vadd.f32 %v351, %v531
    %v533 = vpop.f32.mrb[0].mxu0
    %v534 = vpop.f32.mrb[0].mxu0
    %v535 = vadd.f32 %v351, %v534
    %v536 = vpop.f32.mrb[0].mxu0
    %537 = vmatprep.mubr.bf16.mxu0 %v296
    %538 = vmatmul.mubr.bf16.gmra.mrb[0].mxu0 %v295
    %v539 = vpop.f32.mrb[0].mxu0
    %v540 = vadd.f32 %v351, %v539
    %v541 = vpop.f32.mrb[0].mxu0
    %v542 = vpop.f32.mrb[0].mxu0
    %v543 = vadd.f32 %v351, %v542
    %v544 = vpop.f32.mrb[0].mxu0
    %545 = vdwg.mxu0
    %546 = vmatprep.subr.bf16.mxu0 0
    %547 = vmatpush1.bf16.msra.mxu0 %v465
    %548 = vmatprep.subr.bf16.mxu0 0
    %549 = vmatpush1.bf16.msra.mxu0 %v466
    %550 = vmatprep.subr.bf16.mxu0 0
    %551 = vmatpush1.bf16.msra.mxu0 %v467
    %552 = vmatprep.subr.bf16.mxu0 0
    %553 = vmatpush1.bf16.msra.mxu0 %v468
    %554 = vmatprep.subr.bf16.mxu0 0
    %555 = vmatpush1.bf16.msra.mxu0 %v469
    %556 = vmatprep.subr.bf16.mxu0 0
    %557 = vmatpush1.bf16.msra.mxu0 %v470
    %558 = vmatprep.subr.bf16.mxu0 0
    %559 = vmatpush1.bf16.msra.mxu0 %v471
    %560 = vmatprep.subr.bf16.mxu0 0
    %561 = vmatpush1.bf16.msra.mxu0 %v472
    %562 = vmatprep.subr.bf16.mxu0 0
    %563 = vmatpush1.bf16.msra.mxu0 0
    %564 = vmatprep.subr.bf16.mxu0 0
    %565 = vmatpush1.bf16.msra.mxu0 0
    %566 = vmatprep.subr.bf16.mxu0 0
    %567 = vmatpush1.bf16.msra.mxu0 0
    %568 = vmatprep.subr.bf16.mxu0 0
    %569 = vmatpush1.bf16.msra.mxu0 0
    %570 = vmatprep.subr.bf16.mxu0 0
    %571 = vmatpush1.bf16.msra.mxu0 0
    %572 = vmatprep.subr.bf16.mxu0 0
    %573 = vmatpush1.bf16.msra.mxu0 0
    %574 = vmatprep.subr.bf16.mxu0 0
    %575 = vmatpush1.bf16.msra.mxu0 0
    %576 = vmatprep.subr.bf16.mxu0 0
    %577 = vmatpush1.bf16.msra.mxu0 0
    %578 = vmatprep.mubr.bf16.mxu0 0
    %579 = vmatmul.mubr.bf16.gmra.mrb[0].mxu0 %v294
    %v580 = vpop.f32.mrb[0].mxu0
    %v581 = vadd.f32 %v532, %v580
    %v582 = vpop.f32.mrb[0].mxu0
    %v583 = vpop.f32.mrb[0].mxu0
    %v584 = vadd.f32 %v535, %v583
    %v585 = vpop.f32.mrb[0].mxu0
    %586 = vmatprep.mubr.bf16.mxu0 0
    %587 = vmatmul.mubr.bf16.gmra.mrb[0].mxu0 %v297
    %v588 = vpop.f32.mrb[0].mxu0
    %v589 = vadd.f32 %v540, %v588
    %v590 = vpop.f32.mrb[0].mxu0
    %v591 = vpop.f32.mrb[0].mxu0
    %v592 = vadd.f32 %v543, %v591
    %v593 = vpop.f32.mrb[0].mxu0
    %594 = vdwg.mxu0
    %595 = vst [vmem:[#allocation5] sm:$0x3] %v581
    %v598 = vunpack.c.l.s4 1983009808
    %v599 = vunpack.c.0.s8 %v598
    %v600 = vlaneseq
    %v601 = vshrl.u32 %v600, 7
    %v602 = vsub.s32 %v599, %v601
    %v603 = vrot.slane %v581, %v602
    %v604 = vcombine.high %v603, %v603
    %606 = vst [vmem:[#allocation5 + $0x2] sm:$0x3] %v604
    %v607 = vcombine.high %v581, %v581
    %v609 = vunpack.c.l.s4 1983009808
    %v610 = vunpack.c.0.s8 %v609
    %v611 = vlaneseq
    %v612 = vshrl.u32 %v611, 7
    %v613 = vsub.s32 %v610, %v612
    %v614 = vrot.slane %v607, %v613
    %616 = vst [vmem:[#allocation5 + $0x4] sm:$0x3] %v614
    %v617 = vcombine.high %v614, %v614
    %619 = vst [vmem:[#allocation5 + $0x6] sm:$0x3] %v617
    %620 = vst [vmem:[#allocation5 + $0x8] sm:$0x3] %v584
    %v623 = vunpack.c.l.s4 1983009808
    %v624 = vunpack.c.0.s8 %v623
    %v625 = vlaneseq
    %v626 = vshrl.u32 %v625, 7
    %v627 = vsub.s32 %v624, %v626
    %v628 = vrot.slane %v584, %v627
    %v629 = vcombine.high %v628, %v628
    %631 = vst [vmem:[#allocation5 + $0xa] sm:$0x3] %v629
    %v632 = vcombine.high %v584, %v584
    %v634 = vunpack.c.l.s4 1983009808
    %v635 = vunpack.c.0.s8 %v634
    %v636 = vlaneseq
    %v637 = vshrl.u32 %v636, 7
    %v638 = vsub.s32 %v635, %v637
    %v639 = vrot.slane %v632, %v638
    %641 = vst [vmem:[#allocation5 + $0xc] sm:$0x3] %v639
    %v642 = vcombine.high %v639, %v639
    %644 = vst [vmem:[#allocation5 + $0xe] sm:$0x3] %v642
    %645 = vst [vmem:[#allocation5 + $0x10] sm:$0x3] %v589
    %v648 = vunpack.c.l.s4 1983009808
    %v649 = vunpack.c.0.s8 %v648
    %v650 = vlaneseq
    %v651 = vshrl.u32 %v650, 7
    %v652 = vsub.s32 %v649, %v651
    %v653 = vrot.slane %v589, %v652
    %v654 = vcombine.high %v653, %v653
    %656 = vst [vmem:[#allocation5 + $0x12] sm:$0x3] %v654
    %v657 = vcombine.high %v589, %v589
    %v659 = vunpack.c.l.s4 1983009808
    %v660 = vunpack.c.0.s8 %v659
    %v661 = vlaneseq
    %v662 = vshrl.u32 %v661, 7
    %v663 = vsub.s32 %v660, %v662
    %v664 = vrot.slane %v657, %v663
    %666 = vst [vmem:[#allocation5 + $0x14] sm:$0x3] %v664
    %v667 = vcombine.high %v664, %v664
    %669 = vst [vmem:[#allocation5 + $0x16] sm:$0x3] %v667
    %670 = vst [vmem:[#allocation5 + $0x18] sm:$0x3] %v592
    %v673 = vunpack.c.l.s4 1983009808
    %v674 = vunpack.c.0.s8 %v673
    %v675 = vlaneseq
    %v676 = vshrl.u32 %v675, 7
    %v677 = vsub.s32 %v674, %v676
    %v678 = vrot.slane %v592, %v677
    %v679 = vcombine.high %v678, %v678
    %681 = vst [vmem:[#allocation5 + $0x1a] sm:$0x3] %v679
    %v682 = vcombine.high %v592, %v592
    %v684 = vunpack.c.l.s4 1983009808
    %v685 = vunpack.c.0.s8 %v684
    %v686 = vlaneseq
    %v687 = vshrl.u32 %v686, 7
    %v688 = vsub.s32 %v685, %v687
    %v689 = vrot.slane %v682, %v688
    %691 = vst [vmem:[#allocation5 + $0x1c] sm:$0x3] %v689
    %v692 = vcombine.high %v689, %v689
    %694 = vst [vmem:[#allocation5 + $0x1e] sm:$0x3] %v692
    %v695 = vld [vmem:[#allocation5] sm:$0xff]
    %v696 = vld [vmem:[#allocation5 + $0x8] sm:$0xff]
    %v697 = vld [vmem:[#allocation5 + $0x10] sm:$0xff]
    %v698 = vld [vmem:[#allocation5 + $0x18] sm:$0xff]
    %v703 = vcombine.high %v695, %v695
    %v705 = vunpack.c.l.s4 1983009808
    %v706 = vunpack.c.0.s8 %v705
    %v707 = vlaneseq
    %v708 = vshrl.u32 %v707, 7
    %v709 = vsub.s32 %v706, %v708
    %v710 = vrot.slane %v695, %v709
    %v712 = vunpack.c.l.s4 1983009808
    %v713 = vunpack.c.0.s8 %v712
    %v714 = vlaneseq
    %v715 = vshrl.u32 %v714, 7
    %v716 = vsub.s32 %v713, %v715
    %v717 = vrot.slane %v703, %v716
    %v718 = vcombine.high %v710, %v710
    %v719 = vcombine.high %v717, %v717
    %v720 = vcombine.high %v696, %v696
    %v722 = vunpack.c.l.s4 1983009808
    %v723 = vunpack.c.0.s8 %v722
    %v724 = vlaneseq
    %v725 = vshrl.u32 %v724, 7
    %v726 = vsub.s32 %v723, %v725
    %v727 = vrot.slane %v696, %v726
    %v729 = vunpack.c.l.s4 1983009808
    %v730 = vunpack.c.0.s8 %v729
    %v731 = vlaneseq
    %v732 = vshrl.u32 %v731, 7
    %v733 = vsub.s32 %v730, %v732
    %v734 = vrot.slane %v720, %v733
    %v735 = vcombine.high %v727, %v727
    %v736 = vcombine.high %v734, %v734
    %v737 = vcombine.high %v697, %v697
    %v739 = vunpack.c.l.s4 1983009808
    %v740 = vunpack.c.0.s8 %v739
    %v741 = vlaneseq
    %v742 = vshrl.u32 %v741, 7
    %v743 = vsub.s32 %v740, %v742
    %v744 = vrot.slane %v697, %v743
    %v746 = vunpack.c.l.s4 1983009808
    %v747 = vunpack.c.0.s8 %v746
    %v748 = vlaneseq
    %v749 = vshrl.u32 %v748, 7
    %v750 = vsub.s32 %v747, %v749
    %v751 = vrot.slane %v737, %v750
    %v752 = vcombine.high %v744, %v744
    %v753 = vcombine.high %v751, %v751
    %v754 = vcombine.high %v698, %v698
    %v756 = vunpack.c.l.s4 1983009808
    %v757 = vunpack.c.0.s8 %v756
    %v758 = vlaneseq
    %v759 = vshrl.u32 %v758, 7
    %v760 = vsub.s32 %v757, %v759
    %v761 = vrot.slane %v698, %v760
    %v763 = vunpack.c.l.s4 1983009808
    %v764 = vunpack.c.0.s8 %v763
    %v765 = vlaneseq
    %v766 = vshrl.u32 %v765, 7
    %v767 = vsub.s32 %v764, %v766
    %v768 = vrot.slane %v754, %v767
    %v769 = vcombine.high %v761, %v761
    %v770 = vcombine.high %v768, %v768
    %v787 = vpack.c.bf16 %v710, %v710
    %v788 = vpack.c.bf16 %v718, %v718
    %v789 = vpack.c.bf16 %v717, %v717
    %v790 = vpack.c.bf16 %v719, %v719
    %v791 = vpack.c.bf16 %v727, %v727
    %v792 = vpack.c.bf16 %v735, %v735
    %v793 = vpack.c.bf16 %v734, %v734
    %v794 = vpack.c.bf16 %v736, %v736
    %v795 = vpack.c.bf16 %v744, %v744
    %v796 = vpack.c.bf16 %v752, %v752
    %v797 = vpack.c.bf16 %v751, %v751
    %v798 = vpack.c.bf16 %v753, %v753
    %v799 = vpack.c.bf16 %v761, %v761
    %v800 = vpack.c.bf16 %v769, %v769
    %v801 = vpack.c.bf16 %v768, %v768
    %v802 = vpack.c.bf16 %v770, %v770
    %v803 = vld [vmem:[%s5] sm:$0xf]
    %v804 = vld [vmem:[%s5 + $0x4] sm:$0xf]
    %v805 = vld [vmem:[%s5 + $0x8] sm:$0xf]
    %v806 = vld [vmem:[%s5 + $0xc] sm:$0xf]
    %v807 = vld [vmem:[%s5 + $0x10] sm:$0xf]
    %v808 = vld [vmem:[%s5 + $0x14] sm:$0xf]
    %v809 = vld [vmem:[%s5 + $0x18] sm:$0xf]
    %v810 = vld [vmem:[%s5 + $0x1c] sm:$0xf]
    %v811 = vld [vmem:[%s5 + $0x20] sm:$0xf]
    %v812 = vld [vmem:[%s5 + $0x24] sm:$0xf]
    %v813 = vld [vmem:[%s5 + $0x28] sm:$0xf]
    %v814 = vld [vmem:[%s5 + $0x2c] sm:$0xf]
    %v815 = vld [vmem:[%s5 + $0x30] sm:$0xf]
    %v816 = vld [vmem:[%s5 + $0x34] sm:$0xf]
    %v817 = vld [vmem:[%s5 + $0x38] sm:$0xf]
    %v818 = vld [vmem:[%s5 + $0x3c] sm:$0xf]
    %v819 = vld [vmem:[%s5 + $0x40] sm:$0xf]
    %v820 = vld [vmem:[%s5 + $0x44] sm:$0xf]
    %v821 = vld [vmem:[%s5 + $0x48] sm:$0xf]
    %v822 = vld [vmem:[%s5 + $0x4c] sm:$0xf]
    %v823 = vld [vmem:[%s5 + $0x50] sm:$0xf]
    %v824 = vld [vmem:[%s5 + $0x54] sm:$0xf]
    %v825 = vld [vmem:[%s5 + $0x58] sm:$0xf]
    %v826 = vld [vmem:[%s5 + $0x5c] sm:$0xf]
    %v827 = vld [vmem:[%s5 + $0x60] sm:$0xf]
    %v828 = vld [vmem:[%s5 + $0x64] sm:$0xf]
    %v829 = vld [vmem:[%s5 + $0x68] sm:$0xf]
    %v830 = vld [vmem:[%s5 + $0x6c] sm:$0xf]
    %v831 = vld [vmem:[%s5 + $0x70] sm:$0xf]
    %v832 = vld [vmem:[%s5 + $0x74] sm:$0xf]
    %v833 = vld [vmem:[%s5 + $0x78] sm:$0xf]
    %v834 = vld [vmem:[%s5 + $0x7c] sm:$0xf]
    %v835 = vld [vmem:[%s5 + $0x80] sm:$0xf]
    %v836 = vld [vmem:[%s5 + $0x84] sm:$0xf]
    %v837 = vld [vmem:[%s5 + $0x88] sm:$0xf]
    %v838 = vld [vmem:[%s5 + $0x8c] sm:$0xf]
    %v839 = vld [vmem:[%s5 + $0x90] sm:$0xf]
    %v840 = vld [vmem:[%s5 + $0x94] sm:$0xf]
    %v841 = vld [vmem:[%s5 + $0x98] sm:$0xf]
    %v842 = vld [vmem:[%s5 + $0x9c] sm:$0xf]
    %v843 = vld [vmem:[%s5 + $0xa0] sm:$0xf]
    %v844 = vld [vmem:[%s5 + $0xa4] sm:$0xf]
    %v845 = vld [vmem:[%s5 + $0xa8] sm:$0xf]
    %v846 = vld [vmem:[%s5 + $0xac] sm:$0xf]
    %v847 = vld [vmem:[%s5 + $0xb0] sm:$0xf]
    %v848 = vld [vmem:[%s5 + $0xb4] sm:$0xf]
    %v849 = vld [vmem:[%s5 + $0xb8] sm:$0xf]
    %v850 = vld [vmem:[%s5 + $0xbc] sm:$0xf]
    %v851 = vld [vmem:[%s5 + $0xc0] sm:$0xf]
    %v852 = vld [vmem:[%s5 + $0xc4] sm:$0xf]
    %v853 = vld [vmem:[%s5 + $0xc8] sm:$0xf]
    %v854 = vld [vmem:[%s5 + $0xcc] sm:$0xf]
    %v855 = vld [vmem:[%s5 + $0xd0] sm:$0xf]
    %v856 = vld [vmem:[%s5 + $0xd4] sm:$0xf]
    %v857 = vld [vmem:[%s5 + $0xd8] sm:$0xf]
    %v858 = vld [vmem:[%s5 + $0xdc] sm:$0xf]
    %v859 = vld [vmem:[%s5 + $0xe0] sm:$0xf]
    %v860 = vld [vmem:[%s5 + $0xe4] sm:$0xf]
    %v861 = vld [vmem:[%s5 + $0xe8] sm:$0xf]
    %v862 = vld [vmem:[%s5 + $0xec] sm:$0xf]
    %v863 = vld [vmem:[%s5 + $0xf0] sm:$0xf]
    %v864 = vld [vmem:[%s5 + $0xf4] sm:$0xf]
    %v865 = vld [vmem:[%s5 + $0xf8] sm:$0xf]
    %v866 = vld [vmem:[%s5 + $0xfc] sm:$0xf]
    %v867 = vld [vmem:[%s5 + $0x100] sm:$0xf]
    %v868 = vld [vmem:[%s5 + $0x104] sm:$0xf]
    %v869 = vld [vmem:[%s5 + $0x108] sm:$0xf]
    %v870 = vld [vmem:[%s5 + $0x10c] sm:$0xf]
    %v871 = vld [vmem:[%s5 + $0x110] sm:$0xf]
    %v872 = vld [vmem:[%s5 + $0x114] sm:$0xf]
    %v873 = vld [vmem:[%s5 + $0x118] sm:$0xf]
    %v874 = vld [vmem:[%s5 + $0x11c] sm:$0xf]
    %v875 = vld [vmem:[%s5 + $0x120] sm:$0xf]
    %v876 = vld [vmem:[%s5 + $0x124] sm:$0xf]
    %v877 = vld [vmem:[%s5 + $0x128] sm:$0xf]
    %v878 = vld [vmem:[%s5 + $0x12c] sm:$0xf]
    %v879 = vld [vmem:[%s5 + $0x130] sm:$0xf]
    %v880 = vld [vmem:[%s5 + $0x134] sm:$0xf]
    %v881 = vld [vmem:[%s5 + $0x138] sm:$0xf]
    %v882 = vld [vmem:[%s5 + $0x13c] sm:$0xf]
    %v883 = vld [vmem:[%s5 + $0x140] sm:$0xf]
    %v884 = vld [vmem:[%s5 + $0x144] sm:$0xf]
    %v885 = vld [vmem:[%s5 + $0x148] sm:$0xf]
    %v886 = vld [vmem:[%s5 + $0x14c] sm:$0xf]
    %v887 = vld [vmem:[%s5 + $0x150] sm:$0xf]
    %v888 = vld [vmem:[%s5 + $0x154] sm:$0xf]
    %v889 = vld [vmem:[%s5 + $0x158] sm:$0xf]
    %v890 = vld [vmem:[%s5 + $0x15c] sm:$0xf]
    %v891 = vld [vmem:[%s5 + $0x160] sm:$0xf]
    %v892 = vld [vmem:[%s5 + $0x164] sm:$0xf]
    %v893 = vld [vmem:[%s5 + $0x168] sm:$0xf]
    %v894 = vld [vmem:[%s5 + $0x16c] sm:$0xf]
    %v895 = vld [vmem:[%s5 + $0x170] sm:$0xf]
    %v896 = vld [vmem:[%s5 + $0x174] sm:$0xf]
    %v897 = vld [vmem:[%s5 + $0x178] sm:$0xf]
    %v898 = vld [vmem:[%s5 + $0x17c] sm:$0xf]
    %v899 = vld [vmem:[%s5 + $0x180] sm:$0xf]
    %v900 = vld [vmem:[%s5 + $0x184] sm:$0xf]
    %v901 = vld [vmem:[%s5 + $0x188] sm:$0xf]
    %v902 = vld [vmem:[%s5 + $0x18c] sm:$0xf]
    %v903 = vld [vmem:[%s5 + $0x190] sm:$0xf]
    %v904 = vld [vmem:[%s5 + $0x194] sm:$0xf]
    %v905 = vld [vmem:[%s5 + $0x198] sm:$0xf]
    %v906 = vld [vmem:[%s5 + $0x19c] sm:$0xf]
    %v907 = vld [vmem:[%s5 + $0x1a0] sm:$0xf]
    %v908 = vld [vmem:[%s5 + $0x1a4] sm:$0xf]
    %v909 = vld [vmem:[%s5 + $0x1a8] sm:$0xf]
    %v910 = vld [vmem:[%s5 + $0x1ac] sm:$0xf]
    %v911 = vld [vmem:[%s5 + $0x1b0] sm:$0xf]
    %v912 = vld [vmem:[%s5 + $0x1b4] sm:$0xf]
    %v913 = vld [vmem:[%s5 + $0x1b8] sm:$0xf]
    %v914 = vld [vmem:[%s5 + $0x1bc] sm:$0xf]
    %v915 = vld [vmem:[%s5 + $0x1c0] sm:$0xf]
    %v916 = vld [vmem:[%s5 + $0x1c4] sm:$0xf]
    %v917 = vld [vmem:[%s5 + $0x1c8] sm:$0xf]
    %v918 = vld [vmem:[%s5 + $0x1cc] sm:$0xf]
    %v919 = vld [vmem:[%s5 + $0x1d0] sm:$0xf]
    %v920 = vld [vmem:[%s5 + $0x1d4] sm:$0xf]
    %v921 = vld [vmem:[%s5 + $0x1d8] sm:$0xf]
    %v922 = vld [vmem:[%s5 + $0x1dc] sm:$0xf]
    %v923 = vld [vmem:[%s5 + $0x1e0] sm:$0xf]
    %v924 = vld [vmem:[%s5 + $0x1e4] sm:$0xf]
    %v925 = vld [vmem:[%s5 + $0x1e8] sm:$0xf]
    %v926 = vld [vmem:[%s5 + $0x1ec] sm:$0xf]
    %v927 = vld [vmem:[%s5 + $0x1f0] sm:$0xf]
    %v928 = vld [vmem:[%s5 + $0x1f4] sm:$0xf]
    %v929 = vld [vmem:[%s5 + $0x1f8] sm:$0xf]
    %v930 = vld [vmem:[%s5 + $0x1fc] sm:$0xf]
    %v931 = vld [vmem:[%s5 + $0x200] sm:$0xf]
    %v932 = vld [vmem:[%s5 + $0x204] sm:$0xf]
    %v933 = vld [vmem:[%s5 + $0x208] sm:$0xf]
    %v934 = vld [vmem:[%s5 + $0x20c] sm:$0xf]
    %v935 = vld [vmem:[%s5 + $0x210] sm:$0xf]
    %v936 = vld [vmem:[%s5 + $0x214] sm:$0xf]
    %v937 = vld [vmem:[%s5 + $0x218] sm:$0xf]
    %v938 = vld [vmem:[%s5 + $0x21c] sm:$0xf]
    %v939 = vld [vmem:[%s5 + $0x220] sm:$0xf]
    %v940 = vld [vmem:[%s5 + $0x224] sm:$0xf]
    %v941 = vld [vmem:[%s5 + $0x228] sm:$0xf]
    %v942 = vld [vmem:[%s5 + $0x22c] sm:$0xf]
    %v943 = vld [vmem:[%s5 + $0x230] sm:$0xf]
    %v944 = vld [vmem:[%s5 + $0x234] sm:$0xf]
    %v945 = vld [vmem:[%s5 + $0x238] sm:$0xf]
    %v946 = vld [vmem:[%s5 + $0x23c] sm:$0xf]
    %v947 = vld [vmem:[%s5 + $0x240] sm:$0xf]
    %v948 = vld [vmem:[%s5 + $0x244] sm:$0xf]
    %v949 = vld [vmem:[%s5 + $0x248] sm:$0xf]
    %v950 = vld [vmem:[%s5 + $0x24c] sm:$0xf]
    %v951 = vld [vmem:[%s5 + $0x250] sm:$0xf]
    %v952 = vld [vmem:[%s5 + $0x254] sm:$0xf]
    %v953 = vld [vmem:[%s5 + $0x258] sm:$0xf]
    %v954 = vld [vmem:[%s5 + $0x25c] sm:$0xf]
    %v955 = vld [vmem:[%s5 + $0x260] sm:$0xf]
    %v956 = vld [vmem:[%s5 + $0x264] sm:$0xf]
    %v957 = vld [vmem:[%s5 + $0x268] sm:$0xf]
    %v958 = vld [vmem:[%s5 + $0x26c] sm:$0xf]
    %v959 = vld [vmem:[%s5 + $0x270] sm:$0xf]
    %v960 = vld [vmem:[%s5 + $0x274] sm:$0xf]
    %v961 = vld [vmem:[%s5 + $0x278] sm:$0xf]
    %v962 = vld [vmem:[%s5 + $0x27c] sm:$0xf]
    %v963 = vld [vmem:[%s5 + $0x280] sm:$0xf]
    %v964 = vld [vmem:[%s5 + $0x284] sm:$0xf]
    %v965 = vld [vmem:[%s5 + $0x288] sm:$0xf]
    %v966 = vld [vmem:[%s5 + $0x28c] sm:$0xf]
    %v967 = vld [vmem:[%s5 + $0x290] sm:$0xf]
    %v968 = vld [vmem:[%s5 + $0x294] sm:$0xf]
    %v969 = vld [vmem:[%s5 + $0x298] sm:$0xf]
    %v970 = vld [vmem:[%s5 + $0x29c] sm:$0xf]
    %v971 = vld [vmem:[%s5 + $0x2a0] sm:$0xf]
    %v972 = vld [vmem:[%s5 + $0x2a4] sm:$0xf]
    %v973 = vld [vmem:[%s5 + $0x2a8] sm:$0xf]
    %v974 = vld [vmem:[%s5 + $0x2ac] sm:$0xf]
    %v975 = vld [vmem:[%s5 + $0x2b0] sm:$0xf]
    %v976 = vld [vmem:[%s5 + $0x2b4] sm:$0xf]
    %v977 = vld [vmem:[%s5 + $0x2b8] sm:$0xf]
    %v978 = vld [vmem:[%s5 + $0x2bc] sm:$0xf]
    %v979 = vld [vmem:[%s5 + $0x2c0] sm:$0xf]
    %v980 = vld [vmem:[%s5 + $0x2c4] sm:$0xf]
    %v981 = vld [vmem:[%s5 + $0x2c8] sm:$0xf]
    %v982 = vld [vmem:[%s5 + $0x2cc] sm:$0xf]
    %v983 = vld [vmem:[%s5 + $0x2d0] sm:$0xf]
    %v984 = vld [vmem:[%s5 + $0x2d4] sm:$0xf]
    %v985 = vld [vmem:[%s5 + $0x2d8] sm:$0xf]
    %v986 = vld [vmem:[%s5 + $0x2dc] sm:$0xf]
    %v987 = vld [vmem:[%s5 + $0x2e0] sm:$0xf]
    %v988 = vld [vmem:[%s5 + $0x2e4] sm:$0xf]
    %v989 = vld [vmem:[%s5 + $0x2e8] sm:$0xf]
    %v990 = vld [vmem:[%s5 + $0x2ec] sm:$0xf]
    %v991 = vld [vmem:[%s5 + $0x2f0] sm:$0xf]
    %v992 = vld [vmem:[%s5 + $0x2f4] sm:$0xf]
    %v993 = vld [vmem:[%s5 + $0x2f8] sm:$0xf]
    %v994 = vld [vmem:[%s5 + $0x2fc] sm:$0xf]
    %v995 = vld [vmem:[%s5 + $0x300] sm:$0xf]
    %v996 = vld [vmem:[%s5 + $0x304] sm:$0xf]
    %v997 = vld [vmem:[%s5 + $0x308] sm:$0xf]
    %v998 = vld [vmem:[%s5 + $0x30c] sm:$0xf]
    %v999 = vld [vmem:[%s5 + $0x310] sm:$0xf]
    %v1000 = vld [vmem:[%s5 + $0x314] sm:$0xf]
    %v1001 = vld [vmem:[%s5 + $0x318] sm:$0xf]
    %v1002 = vld [vmem:[%s5 + $0x31c] sm:$0xf]
    %v1003 = vld [vmem:[%s5 + $0x320] sm:$0xf]
    %v1004 = vld [vmem:[%s5 + $0x324] sm:$0xf]
    %v1005 = vld [vmem:[%s5 + $0x328] sm:$0xf]
    %v1006 = vld [vmem:[%s5 + $0x32c] sm:$0xf]
    %v1007 = vld [vmem:[%s5 + $0x330] sm:$0xf]
    %v1008 = vld [vmem:[%s5 + $0x334] sm:$0xf]
    %v1009 = vld [vmem:[%s5 + $0x338] sm:$0xf]
    %v1010 = vld [vmem:[%s5 + $0x33c] sm:$0xf]
    %v1011 = vld [vmem:[%s5 + $0x340] sm:$0xf]
    %v1012 = vld [vmem:[%s5 + $0x344] sm:$0xf]
    %v1013 = vld [vmem:[%s5 + $0x348] sm:$0xf]
    %v1014 = vld [vmem:[%s5 + $0x34c] sm:$0xf]
    %v1015 = vld [vmem:[%s5 + $0x350] sm:$0xf]
    %v1016 = vld [vmem:[%s5 + $0x354] sm:$0xf]
    %v1017 = vld [vmem:[%s5 + $0x358] sm:$0xf]
    %v1018 = vld [vmem:[%s5 + $0x35c] sm:$0xf]
    %v1019 = vld [vmem:[%s5 + $0x360] sm:$0xf]
    %v1020 = vld [vmem:[%s5 + $0x364] sm:$0xf]
    %v1021 = vld [vmem:[%s5 + $0x368] sm:$0xf]
    %v1022 = vld [vmem:[%s5 + $0x36c] sm:$0xf]
    %v1023 = vld [vmem:[%s5 + $0x370] sm:$0xf]
    %v1024 = vld [vmem:[%s5 + $0x374] sm:$0xf]
    %v1025 = vld [vmem:[%s5 + $0x378] sm:$0xf]
    %v1026 = vld [vmem:[%s5 + $0x37c] sm:$0xf]
    %v1027 = vld [vmem:[%s5 + $0x380] sm:$0xf]
    %v1028 = vld [vmem:[%s5 + $0x384] sm:$0xf]
    %v1029 = vld [vmem:[%s5 + $0x388] sm:$0xf]
    %v1030 = vld [vmem:[%s5 + $0x38c] sm:$0xf]
    %v1031 = vld [vmem:[%s5 + $0x390] sm:$0xf]
    %v1032 = vld [vmem:[%s5 + $0x394] sm:$0xf]
    %v1033 = vld [vmem:[%s5 + $0x398] sm:$0xf]
    %v1034 = vld [vmem:[%s5 + $0x39c] sm:$0xf]
    %v1035 = vld [vmem:[%s5 + $0x3a0] sm:$0xf]
    %v1036 = vld [vmem:[%s5 + $0x3a4] sm:$0xf]
    %v1037 = vld [vmem:[%s5 + $0x3a8] sm:$0xf]
    %v1038 = vld [vmem:[%s5 + $0x3ac] sm:$0xf]
    %v1039 = vld [vmem:[%s5 + $0x3b0] sm:$0xf]
    %v1040 = vld [vmem:[%s5 + $0x3b4] sm:$0xf]
    %v1041 = vld [vmem:[%s5 + $0x3b8] sm:$0xf]
    %v1042 = vld [vmem:[%s5 + $0x3bc] sm:$0xf]
    %v1043 = vld [vmem:[%s5 + $0x3c0] sm:$0xf]
    %v1044 = vld [vmem:[%s5 + $0x3c4] sm:$0xf]
    %v1045 = vld [vmem:[%s5 + $0x3c8] sm:$0xf]
    %v1046 = vld [vmem:[%s5 + $0x3cc] sm:$0xf]
    %v1047 = vld [vmem:[%s5 + $0x3d0] sm:$0xf]
    %v1048 = vld [vmem:[%s5 + $0x3d4] sm:$0xf]
    %v1049 = vld [vmem:[%s5 + $0x3d8] sm:$0xf]
    %v1050 = vld [vmem:[%s5 + $0x3dc] sm:$0xf]
    %v1051 = vld [vmem:[%s5 + $0x3e0] sm:$0xf]
    %v1052 = vld [vmem:[%s5 + $0x3e4] sm:$0xf]
    %v1053 = vld [vmem:[%s5 + $0x3e8] sm:$0xf]
    %v1054 = vld [vmem:[%s5 + $0x3ec] sm:$0xf]
    %v1055 = vld [vmem:[%s5 + $0x3f0] sm:$0xf]
    %v1056 = vld [vmem:[%s5 + $0x3f4] sm:$0xf]
    %v1057 = vld [vmem:[%s5 + $0x3f8] sm:$0xf]
    %v1058 = vld [vmem:[%s5 + $0x3fc] sm:$0xf]
    %v1059 = vld [vmem:[%s6] sm:$0x1]
    %v1061 = vlaneseq
    %v1062 = vshrl.u32 %v1061, 7
    %v1063 = vsub.s32 0, %v1062
    %v1064 = vrot.slane %v1059, %v1063
    %v1322 = vunpack.c.l.b16 %v803
    %v1323 = vunpack.c.l.b16 %v804
    %v1324 = vunpack.c.l.b16 %v805
    %v1325 = vunpack.c.l.b16 %v806
    %v1326 = vunpack.c.l.b16 %v807
    %v1327 = vunpack.c.l.b16 %v808
    %v1328 = vunpack.c.l.b16 %v809
    %v1329 = vunpack.c.l.b16 %v810
    %v1330 = vunpack.c.l.b16 %v811
    %v1331 = vunpack.c.l.b16 %v812
    %v1332 = vunpack.c.l.b16 %v813
    %v1333 = vunpack.c.l.b16 %v814
    %v1334 = vunpack.c.l.b16 %v815
    %v1335 = vunpack.c.l.b16 %v816
    %v1336 = vunpack.c.l.b16 %v817
    %v1337 = vunpack.c.l.b16 %v818
    %v1338 = vunpack.c.l.b16 %v819
    %v1339 = vunpack.c.l.b16 %v820
    %v1340 = vunpack.c.l.b16 %v821
    %v1341 = vunpack.c.l.b16 %v822
    %v1342 = vunpack.c.l.b16 %v823
    %v1343 = vunpack.c.l.b16 %v824
    %v1344 = vunpack.c.l.b16 %v825
    %v1345 = vunpack.c.l.b16 %v826
    %v1346 = vunpack.c.l.b16 %v827
    %v1347 = vunpack.c.l.b16 %v828
    %v1348 = vunpack.c.l.b16 %v829
    %v1349 = vunpack.c.l.b16 %v830
    %v1350 = vunpack.c.l.b16 %v831
    %v1351 = vunpack.c.l.b16 %v832
    %v1352 = vunpack.c.l.b16 %v833
    %v1353 = vunpack.c.l.b16 %v834
    %v1354 = vunpack.c.l.b16 %v835
    %v1355 = vunpack.c.l.b16 %v836
    %v1356 = vunpack.c.l.b16 %v837
    %v1357 = vunpack.c.l.b16 %v838
    %v1358 = vunpack.c.l.b16 %v839
    %v1359 = vunpack.c.l.b16 %v840
    %v1360 = vunpack.c.l.b16 %v841
    %v1361 = vunpack.c.l.b16 %v842
    %v1362 = vunpack.c.l.b16 %v843
    %v1363 = vunpack.c.l.b16 %v844
    %v1364 = vunpack.c.l.b16 %v845
    %v1365 = vunpack.c.l.b16 %v846
    %v1366 = vunpack.c.l.b16 %v847
    %v1367 = vunpack.c.l.b16 %v848
    %v1368 = vunpack.c.l.b16 %v849
    %v1369 = vunpack.c.l.b16 %v850
    %v1370 = vunpack.c.l.b16 %v851
    %v1371 = vunpack.c.l.b16 %v852
    %v1372 = vunpack.c.l.b16 %v853
    %v1373 = vunpack.c.l.b16 %v854
    %v1374 = vunpack.c.l.b16 %v855
    %v1375 = vunpack.c.l.b16 %v856
    %v1376 = vunpack.c.l.b16 %v857
    %v1377 = vunpack.c.l.b16 %v858
    %v1378 = vunpack.c.l.b16 %v859
    %v1379 = vunpack.c.l.b16 %v860
    %v1380 = vunpack.c.l.b16 %v861
    %v1381 = vunpack.c.l.b16 %v862
    %v1382 = vunpack.c.l.b16 %v863
    %v1383 = vunpack.c.l.b16 %v864
    %v1384 = vunpack.c.l.b16 %v865
    %v1385 = vunpack.c.l.b16 %v866
    %v1386 = vunpack.c.l.b16 %v867
    %v1387 = vunpack.c.l.b16 %v868
    %v1388 = vunpack.c.l.b16 %v869
    %v1389 = vunpack.c.l.b16 %v870
    %v1390 = vunpack.c.l.b16 %v871
    %v1391 = vunpack.c.l.b16 %v872
    %v1392 = vunpack.c.l.b16 %v873
    %v1393 = vunpack.c.l.b16 %v874
    %v1394 = vunpack.c.l.b16 %v875
    %v1395 = vunpack.c.l.b16 %v876
    %v1396 = vunpack.c.l.b16 %v877
    %v1397 = vunpack.c.l.b16 %v878
    %v1398 = vunpack.c.l.b16 %v879
    %v1399 = vunpack.c.l.b16 %v880
    %v1400 = vunpack.c.l.b16 %v881
    %v1401 = vunpack.c.l.b16 %v882
    %v1402 = vunpack.c.l.b16 %v883
    %v1403 = vunpack.c.l.b16 %v884
    %v1404 = vunpack.c.l.b16 %v885
    %v1405 = vunpack.c.l.b16 %v886
    %v1406 = vunpack.c.l.b16 %v887
    %v1407 = vunpack.c.l.b16 %v888
    %v1408 = vunpack.c.l.b16 %v889
    %v1409 = vunpack.c.l.b16 %v890
    %v1410 = vunpack.c.l.b16 %v891
    %v1411 = vunpack.c.l.b16 %v892
    %v1412 = vunpack.c.l.b16 %v893
    %v1413 = vunpack.c.l.b16 %v894
    %v1414 = vunpack.c.l.b16 %v895
    %v1415 = vunpack.c.l.b16 %v896
    %v1416 = vunpack.c.l.b16 %v897
    %v1417 = vunpack.c.l.b16 %v898
    %v1418 = vunpack.c.l.b16 %v899
    %v1419 = vunpack.c.l.b16 %v900
    %v1420 = vunpack.c.l.b16 %v901
    %v1421 = vunpack.c.l.b16 %v902
    %v1422 = vunpack.c.l.b16 %v903
    %v1423 = vunpack.c.l.b16 %v904
    %v1424 = vunpack.c.l.b16 %v905
    %v1425 = vunpack.c.l.b16 %v906
    %v1426 = vunpack.c.l.b16 %v907
    %v1427 = vunpack.c.l.b16 %v908
    %v1428 = vunpack.c.l.b16 %v909
    %v1429 = vunpack.c.l.b16 %v910
    %v1430 = vunpack.c.l.b16 %v911
    %v1431 = vunpack.c.l.b16 %v912
    %v1432 = vunpack.c.l.b16 %v913
    %v1433 = vunpack.c.l.b16 %v914
    %v1434 = vunpack.c.l.b16 %v915
    %v1435 = vunpack.c.l.b16 %v916
    %v1436 = vunpack.c.l.b16 %v917
    %v1437 = vunpack.c.l.b16 %v918
    %v1438 = vunpack.c.l.b16 %v919
    %v1439 = vunpack.c.l.b16 %v920
    %v1440 = vunpack.c.l.b16 %v921
    %v1441 = vunpack.c.l.b16 %v922
    %v1442 = vunpack.c.l.b16 %v923
    %v1443 = vunpack.c.l.b16 %v924
    %v1444 = vunpack.c.l.b16 %v925
    %v1445 = vunpack.c.l.b16 %v926
    %v1446 = vunpack.c.l.b16 %v927
    %v1447 = vunpack.c.l.b16 %v928
    %v1448 = vunpack.c.l.b16 %v929
    %v1449 = vunpack.c.l.b16 %v930
    %v1450 = vunpack.c.l.b16 %v931
    %v1451 = vunpack.c.l.b16 %v932
    %v1452 = vunpack.c.l.b16 %v933
    %v1453 = vunpack.c.l.b16 %v934
    %v1454 = vunpack.c.l.b16 %v935
    %v1455 = vunpack.c.l.b16 %v936
    %v1456 = vunpack.c.l.b16 %v937
    %v1457 = vunpack.c.l.b16 %v938
    %v1458 = vunpack.c.l.b16 %v939
    %v1459 = vunpack.c.l.b16 %v940
    %v1460 = vunpack.c.l.b16 %v941
    %v1461 = vunpack.c.l.b16 %v942
    %v1462 = vunpack.c.l.b16 %v943
    %v1463 = vunpack.c.l.b16 %v944
    %v1464 = vunpack.c.l.b16 %v945
    %v1465 = vunpack.c.l.b16 %v946
    %v1466 = vunpack.c.l.b16 %v947
    %v1467 = vunpack.c.l.b16 %v948
    %v1468 = vunpack.c.l.b16 %v949
    %v1469 = vunpack.c.l.b16 %v950
    %v1470 = vunpack.c.l.b16 %v951
    %v1471 = vunpack.c.l.b16 %v952
    %v1472 = vunpack.c.l.b16 %v953
    %v1473 = vunpack.c.l.b16 %v954
    %v1474 = vunpack.c.l.b16 %v955
    %v1475 = vunpack.c.l.b16 %v956
    %v1476 = vunpack.c.l.b16 %v957
    %v1477 = vunpack.c.l.b16 %v958
    %v1478 = vunpack.c.l.b16 %v959
    %v1479 = vunpack.c.l.b16 %v960
    %v1480 = vunpack.c.l.b16 %v961
    %v1481 = vunpack.c.l.b16 %v962
    %v1482 = vunpack.c.l.b16 %v963
    %v1483 = vunpack.c.l.b16 %v964
    %v1484 = vunpack.c.l.b16 %v965
    %v1485 = vunpack.c.l.b16 %v966
    %v1486 = vunpack.c.l.b16 %v967
    %v1487 = vunpack.c.l.b16 %v968
    %v1488 = vunpack.c.l.b16 %v969
    %v1489 = vunpack.c.l.b16 %v970
    %v1490 = vunpack.c.l.b16 %v971
    %v1491 = vunpack.c.l.b16 %v972
    %v1492 = vunpack.c.l.b16 %v973
    %v1493 = vunpack.c.l.b16 %v974
    %v1494 = vunpack.c.l.b16 %v975
    %v1495 = vunpack.c.l.b16 %v976
    %v1496 = vunpack.c.l.b16 %v977
    %v1497 = vunpack.c.l.b16 %v978
    %v1498 = vunpack.c.l.b16 %v979
    %v1499 = vunpack.c.l.b16 %v980
    %v1500 = vunpack.c.l.b16 %v981
    %v1501 = vunpack.c.l.b16 %v982
    %v1502 = vunpack.c.l.b16 %v983
    %v1503 = vunpack.c.l.b16 %v984
    %v1504 = vunpack.c.l.b16 %v985
    %v1505 = vunpack.c.l.b16 %v986
    %v1506 = vunpack.c.l.b16 %v987
    %v1507 = vunpack.c.l.b16 %v988
    %v1508 = vunpack.c.l.b16 %v989
    %v1509 = vunpack.c.l.b16 %v990
    %v1510 = vunpack.c.l.b16 %v991
    %v1511 = vunpack.c.l.b16 %v992
    %v1512 = vunpack.c.l.b16 %v993
    %v1513 = vunpack.c.l.b16 %v994
    %v1514 = vunpack.c.l.b16 %v995
    %v1515 = vunpack.c.l.b16 %v996
    %v1516 = vunpack.c.l.b16 %v997
    %v1517 = vunpack.c.l.b16 %v998
    %v1518 = vunpack.c.l.b16 %v999
    %v1519 = vunpack.c.l.b16 %v1000
    %v1520 = vunpack.c.l.b16 %v1001
    %v1521 = vunpack.c.l.b16 %v1002
    %v1522 = vunpack.c.l.b16 %v1003
    %v1523 = vunpack.c.l.b16 %v1004
    %v1524 = vunpack.c.l.b16 %v1005
    %v1525 = vunpack.c.l.b16 %v1006
    %v1526 = vunpack.c.l.b16 %v1007
    %v1527 = vunpack.c.l.b16 %v1008
    %v1528 = vunpack.c.l.b16 %v1009
    %v1529 = vunpack.c.l.b16 %v1010
    %v1530 = vunpack.c.l.b16 %v1011
    %v1531 = vunpack.c.l.b16 %v1012
    %v1532 = vunpack.c.l.b16 %v1013
    %v1533 = vunpack.c.l.b16 %v1014
    %v1534 = vunpack.c.l.b16 %v1015
    %v1535 = vunpack.c.l.b16 %v1016
    %v1536 = vunpack.c.l.b16 %v1017
    %v1537 = vunpack.c.l.b16 %v1018
    %v1538 = vunpack.c.l.b16 %v1019
    %v1539 = vunpack.c.l.b16 %v1020
    %v1540 = vunpack.c.l.b16 %v1021
    %v1541 = vunpack.c.l.b16 %v1022
    %v1542 = vunpack.c.l.b16 %v1023
    %v1543 = vunpack.c.l.b16 %v1024
    %v1544 = vunpack.c.l.b16 %v1025
    %v1545 = vunpack.c.l.b16 %v1026
    %v1546 = vunpack.c.l.b16 %v1027
    %v1547 = vunpack.c.l.b16 %v1028
    %v1548 = vunpack.c.l.b16 %v1029
    %v1549 = vunpack.c.l.b16 %v1030
    %v1550 = vunpack.c.l.b16 %v1031
    %v1551 = vunpack.c.l.b16 %v1032
    %v1552 = vunpack.c.l.b16 %v1033
    %v1553 = vunpack.c.l.b16 %v1034
    %v1554 = vunpack.c.l.b16 %v1035
    %v1555 = vunpack.c.l.b16 %v1036
    %v1556 = vunpack.c.l.b16 %v1037
    %v1557 = vunpack.c.l.b16 %v1038
    %v1558 = vunpack.c.l.b16 %v1039
    %v1559 = vunpack.c.l.b16 %v1040
    %v1560 = vunpack.c.l.b16 %v1041
    %v1561 = vunpack.c.l.b16 %v1042
    %v1562 = vunpack.c.l.b16 %v1043
    %v1563 = vunpack.c.l.b16 %v1044
    %v1564 = vunpack.c.l.b16 %v1045
    %v1565 = vunpack.c.l.b16 %v1046
    %v1566 = vunpack.c.l.b16 %v1047
    %v1567 = vunpack.c.l.b16 %v1048
    %v1568 = vunpack.c.l.b16 %v1049
    %v1569 = vunpack.c.l.b16 %v1050
    %v1570 = vunpack.c.l.b16 %v1051
    %v1571 = vunpack.c.l.b16 %v1052
    %v1572 = vunpack.c.l.b16 %v1053
    %v1573 = vunpack.c.l.b16 %v1054
    %v1574 = vunpack.c.l.b16 %v1055
    %v1575 = vunpack.c.l.b16 %v1056
    %v1576 = vunpack.c.l.b16 %v1057
    %v1577 = vunpack.c.l.b16 %v1058
    %v1578 = vpack.c.b16 %v1323, %v1322
    %v1579 = vpack.c.b16 %v1325, %v1324
    %v1580 = vpack.c.b16 %v1327, %v1326
    %v1581 = vpack.c.b16 %v1329, %v1328
    %v1582 = vpack.c.b16 %v1331, %v1330
    %v1583 = vpack.c.b16 %v1333, %v1332
    %v1584 = vpack.c.b16 %v1335, %v1334
    %v1585 = vpack.c.b16 %v1337, %v1336
    %v1586 = vpack.c.b16 %v1339, %v1338
    %v1587 = vpack.c.b16 %v1341, %v1340
    %v1588 = vpack.c.b16 %v1343, %v1342
    %v1589 = vpack.c.b16 %v1345, %v1344
    %v1590 = vpack.c.b16 %v1347, %v1346
    %v1591 = vpack.c.b16 %v1349, %v1348
    %v1592 = vpack.c.b16 %v1351, %v1350
    %v1593 = vpack.c.b16 %v1353, %v1352
    %v1594 = vpack.c.b16 %v1355, %v1354
    %v1595 = vpack.c.b16 %v1357, %v1356
    %v1596 = vpack.c.b16 %v1359, %v1358
    %v1597 = vpack.c.b16 %v1361, %v1360
    %v1598 = vpack.c.b16 %v1363, %v1362
    %v1599 = vpack.c.b16 %v1365, %v1364
    %v1600 = vpack.c.b16 %v1367, %v1366
    %v1601 = vpack.c.b16 %v1369, %v1368
    %v1602 = vpack.c.b16 %v1371, %v1370
    %v1603 = vpack.c.b16 %v1373, %v1372
    %v1604 = vpack.c.b16 %v1375, %v1374
    %v1605 = vpack.c.b16 %v1377, %v1376
    %v1606 = vpack.c.b16 %v1379, %v1378
    %v1607 = vpack.c.b16 %v1381, %v1380
    %v1608 = vpack.c.b16 %v1383, %v1382
    %v1609 = vpack.c.b16 %v1385, %v1384
    %v1610 = vpack.c.b16 %v1387, %v1386
    %v1611 = vpack.c.b16 %v1389, %v1388
    %v1612 = vpack.c.b16 %v1391, %v1390
    %v1613 = vpack.c.b16 %v1393, %v1392
    %v1614 = vpack.c.b16 %v1395, %v1394
    %v1615 = vpack.c.b16 %v1397, %v1396
    %v1616 = vpack.c.b16 %v1399, %v1398
    %v1617 = vpack.c.b16 %v1401, %v1400
    %v1618 = vpack.c.b16 %v1403, %v1402
    %v1619 = vpack.c.b16 %v1405, %v1404
    %v1620 = vpack.c.b16 %v1407, %v1406
    %v1621 = vpack.c.b16 %v1409, %v1408
    %v1622 = vpack.c.b16 %v1411, %v1410
    %v1623 = vpack.c.b16 %v1413, %v1412
    %v1624 = vpack.c.b16 %v1415, %v1414
    %v1625 = vpack.c.b16 %v1417, %v1416
    %v1626 = vpack.c.b16 %v1419, %v1418
    %v1627 = vpack.c.b16 %v1421, %v1420
    %v1628 = vpack.c.b16 %v1423, %v1422
    %v1629 = vpack.c.b16 %v1425, %v1424
    %v1630 = vpack.c.b16 %v1427, %v1426
    %v1631 = vpack.c.b16 %v1429, %v1428
    %v1632 = vpack.c.b16 %v1431, %v1430
    %v1633 = vpack.c.b16 %v1433, %v1432
    %v1634 = vpack.c.b16 %v1435, %v1434
    %v1635 = vpack.c.b16 %v1437, %v1436
    %v1636 = vpack.c.b16 %v1439, %v1438
    %v1637 = vpack.c.b16 %v1441, %v1440
    %v1638 = vpack.c.b16 %v1443, %v1442
    %v1639 = vpack.c.b16 %v1445, %v1444
    %v1640 = vpack.c.b16 %v1447, %v1446
    %v1641 = vpack.c.b16 %v1449, %v1448
    %v1642 = vpack.c.b16 %v1451, %v1450
    %v1643 = vpack.c.b16 %v1453, %v1452
    %v1644 = vpack.c.b16 %v1455, %v1454
    %v1645 = vpack.c.b16 %v1457, %v1456
    %v1646 = vpack.c.b16 %v1459, %v1458
    %v1647 = vpack.c.b16 %v1461, %v1460
    %v1648 = vpack.c.b16 %v1463, %v1462
    %v1649 = vpack.c.b16 %v1465, %v1464
    %v1650 = vpack.c.b16 %v1467, %v1466
    %v1651 = vpack.c.b16 %v1469, %v1468
    %v1652 = vpack.c.b16 %v1471, %v1470
    %v1653 = vpack.c.b16 %v1473, %v1472
    %v1654 = vpack.c.b16 %v1475, %v1474
    %v1655 = vpack.c.b16 %v1477, %v1476
    %v1656 = vpack.c.b16 %v1479, %v1478
    %v1657 = vpack.c.b16 %v1481, %v1480
    %v1658 = vpack.c.b16 %v1483, %v1482
    %v1659 = vpack.c.b16 %v1485, %v1484
    %v1660 = vpack.c.b16 %v1487, %v1486
    %v1661 = vpack.c.b16 %v1489, %v1488
    %v1662 = vpack.c.b16 %v1491, %v1490
    %v1663 = vpack.c.b16 %v1493, %v1492
    %v1664 = vpack.c.b16 %v1495, %v1494
    %v1665 = vpack.c.b16 %v1497, %v1496
    %v1666 = vpack.c.b16 %v1499, %v1498
    %v1667 = vpack.c.b16 %v1501, %v1500
    %v1668 = vpack.c.b16 %v1503, %v1502
    %v1669 = vpack.c.b16 %v1505, %v1504
    %v1670 = vpack.c.b16 %v1507, %v1506
    %v1671 = vpack.c.b16 %v1509, %v1508
    %v1672 = vpack.c.b16 %v1511, %v1510
    %v1673 = vpack.c.b16 %v1513, %v1512
    %v1674 = vpack.c.b16 %v1515, %v1514
    %v1675 = vpack.c.b16 %v1517, %v1516
    %v1676 = vpack.c.b16 %v1519, %v1518
    %v1677 = vpack.c.b16 %v1521, %v1520
    %v1678 = vpack.c.b16 %v1523, %v1522
    %v1679 = vpack.c.b16 %v1525, %v1524
    %v1680 = vpack.c.b16 %v1527, %v1526
    %v1681 = vpack.c.b16 %v1529, %v1528
    %v1682 = vpack.c.b16 %v1531, %v1530
    %v1683 = vpack.c.b16 %v1533, %v1532
    %v1684 = vpack.c.b16 %v1535, %v1534
    %v1685 = vpack.c.b16 %v1537, %v1536
    %v1686 = vpack.c.b16 %v1539, %v1538
    %v1687 = vpack.c.b16 %v1541, %v1540
    %v1688 = vpack.c.b16 %v1543, %v1542
    %v1689 = vpack.c.b16 %v1545, %v1544
    %v1690 = vpack.c.b16 %v1547, %v1546
    %v1691 = vpack.c.b16 %v1549, %v1548
    %v1692 = vpack.c.b16 %v1551, %v1550
    %v1693 = vpack.c.b16 %v1553, %v1552
    %v1694 = vpack.c.b16 %v1555, %v1554
    %v1695 = vpack.c.b16 %v1557, %v1556
    %v1696 = vpack.c.b16 %v1559, %v1558
    %v1697 = vpack.c.b16 %v1561, %v1560
    %v1698 = vpack.c.b16 %v1563, %v1562
    %v1699 = vpack.c.b16 %v1565, %v1564
    %v1700 = vpack.c.b16 %v1567, %v1566
    %v1701 = vpack.c.b16 %v1569, %v1568
    %v1702 = vpack.c.b16 %v1571, %v1570
    %v1703 = vpack.c.b16 %v1573, %v1572
    %v1704 = vpack.c.b16 %v1575, %v1574
    %v1705 = vpack.c.b16 %v1577, %v1576
    %1834 = vmatprep.subr.bf16.mxu0 0
    %1835 = vmatpush1.bf16.msra.mxu0 %v1578
    %1836 = vmatprep.subr.bf16.mxu0 0
    %1837 = vmatpush1.bf16.msra.mxu0 %v1579
    %1838 = vmatprep.subr.bf16.mxu0 0
    %1839 = vmatpush1.bf16.msra.mxu0 %v1580
    %1840 = vmatprep.subr.bf16.mxu0 0
    %1841 = vmatpush1.bf16.msra.mxu0 %v1581
    %1842 = vmatprep.subr.bf16.mxu0 0
    %1843 = vmatpush1.bf16.msra.mxu0 %v1582
    %1844 = vmatprep.subr.bf16.mxu0 0
    %1845 = vmatpush1.bf16.msra.mxu0 %v1583
    %1846 = vmatprep.subr.bf16.mxu0 0
    %1847 = vmatpush1.bf16.msra.mxu0 %v1584
    %1848 = vmatprep.subr.bf16.mxu0 0
    %1849 = vmatpush1.bf16.msra.mxu0 %v1585
    %1850 = vmatprep.subr.bf16.mxu0 0
    %1851 = vmatpush1.bf16.msra.mxu0 %v1586
    %1852 = vmatprep.subr.bf16.mxu0 0
    %1853 = vmatpush1.bf16.msra.mxu0 %v1587
    %1854 = vmatprep.subr.bf16.mxu0 0
    %1855 = vmatpush1.bf16.msra.mxu0 %v1588
    %1856 = vmatprep.subr.bf16.mxu0 0
    %1857 = vmatpush1.bf16.msra.mxu0 %v1589
    %1858 = vmatprep.subr.bf16.mxu0 0
    %1859 = vmatpush1.bf16.msra.mxu0 %v1590
    %1860 = vmatprep.subr.bf16.mxu0 0
    %1861 = vmatpush1.bf16.msra.mxu0 %v1591
    %1862 = vmatprep.subr.bf16.mxu0 0
    %1863 = vmatpush1.bf16.msra.mxu0 %v1592
    %1864 = vmatprep.subr.bf16.mxu0 0
    %1865 = vmatpush1.bf16.msra.mxu0 %v1593
    %1866 = vmatprep.mubr.bf16.mxu0 %v788
    %1867 = vmatmul.mubr.bf16.gmra.mrb[0].mxu0 %v787
    %v1868 = vpop.f32.mrb[0].mxu0
    %v1869 = vadd.f32 %v1064, %v1868
    %v1870 = vpop.f32.mrb[0].mxu0
    %v1871 = vpop.f32.mrb[0].mxu0
    %v1872 = vpop.f32.mrb[0].mxu0
    %1873 = vdwg.mxu0
    %1874 = vmatprep.subr.bf16.mxu0 0
    %1875 = vmatpush1.bf16.msra.mxu0 %v1594
    %1876 = vmatprep.subr.bf16.mxu0 0
    %1877 = vmatpush1.bf16.msra.mxu0 %v1595
    %1878 = vmatprep.subr.bf16.mxu0 0
    %1879 = vmatpush1.bf16.msra.mxu0 %v1596
    %1880 = vmatprep.subr.bf16.mxu0 0
    %1881 = vmatpush1.bf16.msra.mxu0 %v1597
    %1882 = vmatprep.subr.bf16.mxu0 0
    %1883 = vmatpush1.bf16.msra.mxu0 %v1598
    %1884 = vmatprep.subr.bf16.mxu0 0
    %1885 = vmatpush1.bf16.msra.mxu0 %v1599
    %1886 = vmatprep.subr.bf16.mxu0 0
    %1887 = vmatpush1.bf16.msra.mxu0 %v1600
    %1888 = vmatprep.subr.bf16.mxu0 0
    %1889 = vmatpush1.bf16.msra.mxu0 %v1601
    %1890 = vmatprep.subr.bf16.mxu0 0
    %1891 = vmatpush1.bf16.msra.mxu0 %v1602
    %1892 = vmatprep.subr.bf16.mxu0 0
    %1893 = vmatpush1.bf16.msra.mxu0 %v1603
    %1894 = vmatprep.subr.bf16.mxu0 0
    %1895 = vmatpush1.bf16.msra.mxu0 %v1604
    %1896 = vmatprep.subr.bf16.mxu0 0
    %1897 = vmatpush1.bf16.msra.mxu0 %v1605
    %1898 = vmatprep.subr.bf16.mxu0 0
    %1899 = vmatpush1.bf16.msra.mxu0 %v1606
    %1900 = vmatprep.subr.bf16.mxu0 0
    %1901 = vmatpush1.bf16.msra.mxu0 %v1607
    %1902 = vmatprep.subr.bf16.mxu0 0
    %1903 = vmatpush1.bf16.msra.mxu0 %v1608
    %1904 = vmatprep.subr.bf16.mxu0 0
    %1905 = vmatpush1.bf16.msra.mxu0 %v1609
    %1906 = vmatprep.mubr.bf16.mxu0 %v790
    %1907 = vmatmul.mubr.bf16.gmra.mrb[0].mxu0 %v789
    %v1908 = vpop.f32.mrb[0].mxu0
    %v1909 = vadd.f32 %v1869, %v1908
    %v1910 = vpop.f32.mrb[0].mxu0
    %v1911 = vpop.f32.mrb[0].mxu0
    %v1912 = vpop.f32.mrb[0].mxu0
    %1913 = vdwg.mxu0
    %1914 = vmatprep.subr.bf16.mxu0 0
    %1915 = vmatpush1.bf16.msra.mxu0 %v1610
    %1916 = vmatprep.subr.bf16.mxu0 0
    %1917 = vmatpush1.bf16.msra.mxu0 %v1611
    %1918 = vmatprep.subr.bf16.mxu0 0
    %1919 = vmatpush1.bf16.msra.mxu0 %v1612
    %1920 = vmatprep.subr.bf16.mxu0 0
    %1921 = vmatpush1.bf16.msra.mxu0 %v1613
    %1922 = vmatprep.subr.bf16.mxu0 0
    %1923 = vmatpush1.bf16.msra.mxu0 %v1614
    %1924 = vmatprep.subr.bf16.mxu0 0
    %1925 = vmatpush1.bf16.msra.mxu0 %v1615
    %1926 = vmatprep.subr.bf16.mxu0 0
    %1927 = vmatpush1.bf16.msra.mxu0 %v1616
    %1928 = vmatprep.subr.bf16.mxu0 0
    %1929 = vmatpush1.bf16.msra.mxu0 %v1617
    %1930 = vmatprep.subr.bf16.mxu0 0
    %1931 = vmatpush1.bf16.msra.mxu0 %v1618
    %1932 = vmatprep.subr.bf16.mxu0 0
    %1933 = vmatpush1.bf16.msra.mxu0 %v1619
    %1934 = vmatprep.subr.bf16.mxu0 0
    %1935 = vmatpush1.bf16.msra.mxu0 %v1620
    %1936 = vmatprep.subr.bf16.mxu0 0
    %1937 = vmatpush1.bf16.msra.mxu0 %v1621
    %1938 = vmatprep.subr.bf16.mxu0 0
    %1939 = vmatpush1.bf16.msra.mxu0 %v1622
    %1940 = vmatprep.subr.bf16.mxu0 0
    %1941 = vmatpush1.bf16.msra.mxu0 %v1623
    %1942 = vmatprep.subr.bf16.mxu0 0
    %1943 = vmatpush1.bf16.msra.mxu0 %v1624
    %1944 = vmatprep.subr.bf16.mxu0 0
    %1945 = vmatpush1.bf16.msra.mxu0 %v1625
    %1946 = vmatprep.mubr.bf16.mxu0 %v792
    %1947 = vmatmul.mubr.bf16.gmra.mrb[0].mxu0 %v791
    %v1948 = vpop.f32.mrb[0].mxu0
    %v1949 = vadd.f32 %v1909, %v1948
    %v1950 = vpop.f32.mrb[0].mxu0
    %v1951 = vpop.f32.mrb[0].mxu0
    %v1952 = vpop.f32.mrb[0].mxu0
    %1953 = vdwg.mxu0
    %1954 = vmatprep.subr.bf16.mxu0 0
    %1955 = vmatpush1.bf16.msra.mxu0 %v1626
    %1956 = vmatprep.subr.bf16.mxu0 0
    %1957 = vmatpush1.bf16.msra.mxu0 %v1627
    %1958 = vmatprep.subr.bf16.mxu0 0
    %1959 = vmatpush1.bf16.msra.mxu0 %v1628
    %1960 = vmatprep.subr.bf16.mxu0 0
    %1961 = vmatpush1.bf16.msra.mxu0 %v1629
    %1962 = vmatprep.subr.bf16.mxu0 0
    %1963 = vmatpush1.bf16.msra.mxu0 %v1630
    %1964 = vmatprep.subr.bf16.mxu0 0
    %1965 = vmatpush1.bf16.msra.mxu0 %v1631
    %1966 = vmatprep.subr.bf16.mxu0 0
    %1967 = vmatpush1.bf16.msra.mxu0 %v1632
    %1968 = vmatprep.subr.bf16.mxu0 0
    %1969 = vmatpush1.bf16.msra.mxu0 %v1633
    %1970 = vmatprep.subr.bf16.mxu0 0
    %1971 = vmatpush1.bf16.msra.mxu0 %v1634
    %1972 = vmatprep.subr.bf16.mxu0 0
    %1973 = vmatpush1.bf16.msra.mxu0 %v1635
    %1974 = vmatprep.subr.bf16.mxu0 0
    %1975 = vmatpush1.bf16.msra.mxu0 %v1636
    %1976 = vmatprep.subr.bf16.mxu0 0
    %1977 = vmatpush1.bf16.msra.mxu0 %v1637
    %1978 = vmatprep.subr.bf16.mxu0 0
    %1979 = vmatpush1.bf16.msra.mxu0 %v1638
    %1980 = vmatprep.subr.bf16.mxu0 0
    %1981 = vmatpush1.bf16.msra.mxu0 %v1639
    %1982 = vmatprep.subr.bf16.mxu0 0
    %1983 = vmatpush1.bf16.msra.mxu0 %v1640
    %1984 = vmatprep.subr.bf16.mxu0 0
    %1985 = vmatpush1.bf16.msra.mxu0 %v1641
    %1986 = vmatprep.mubr.bf16.mxu0 %v794
    %1987 = vmatmul.mubr.bf16.gmra.mrb[0].mxu0 %v793
    %v1988 = vpop.f32.mrb[0].mxu0
    %v1989 = vadd.f32 %v1949, %v1988
    %v1990 = vpop.f32.mrb[0].mxu0
    %v1991 = vpop.f32.mrb[0].mxu0
    %v1992 = vpop.f32.mrb[0].mxu0
    %1993 = vdwg.mxu0
    %1994 = vmatprep.subr.bf16.mxu0 0
    %1995 = vmatpush1.bf16.msra.mxu0 %v1642
    %1996 = vmatprep.subr.bf16.mxu0 0
    %1997 = vmatpush1.bf16.msra.mxu0 %v1643
    %1998 = vmatprep.subr.bf16.mxu0 0
    %1999 = vmatpush1.bf16.msra.mxu0 %v1644
    %2000 = vmatprep.subr.bf16.mxu0 0
    %2001 = vmatpush1.bf16.msra.mxu0 %v1645
    %2002 = vmatprep.subr.bf16.mxu0 0
    %2003 = vmatpush1.bf16.msra.mxu0 %v1646
    %2004 = vmatprep.subr.bf16.mxu0 0
    %2005 = vmatpush1.bf16.msra.mxu0 %v1647
    %2006 = vmatprep.subr.bf16.mxu0 0
    %2007 = vmatpush1.bf16.msra.mxu0 %v1648
    %2008 = vmatprep.subr.bf16.mxu0 0
    %2009 = vmatpush1.bf16.msra.mxu0 %v1649
    %2010 = vmatprep.subr.bf16.mxu0 0
    %2011 = vmatpush1.bf16.msra.mxu0 %v1650
    %2012 = vmatprep.subr.bf16.mxu0 0
    %2013 = vmatpush1.bf16.msra.mxu0 %v1651
    %2014 = vmatprep.subr.bf16.mxu0 0
    %2015 = vmatpush1.bf16.msra.mxu0 %v1652
    %2016 = vmatprep.subr.bf16.mxu0 0
    %2017 = vmatpush1.bf16.msra.mxu0 %v1653
    %2018 = vmatprep.subr.bf16.mxu0 0
    %2019 = vmatpush1.bf16.msra.mxu0 %v1654
    %2020 = vmatprep.subr.bf16.mxu0 0
    %2021 = vmatpush1.bf16.msra.mxu0 %v1655
    %2022 = vmatprep.subr.bf16.mxu0 0
    %2023 = vmatpush1.bf16.msra.mxu0 %v1656
    %2024 = vmatprep.subr.bf16.mxu0 0
    %2025 = vmatpush1.bf16.msra.mxu0 %v1657
    %2026 = vmatprep.mubr.bf16.mxu0 %v796
    %2027 = vmatmul.mubr.bf16.gmra.mrb[0].mxu0 %v795
    %v2028 = vpop.f32.mrb[0].mxu0
    %v2029 = vadd.f32 %v1989, %v2028
    %v2030 = vpop.f32.mrb[0].mxu0
    %v2031 = vpop.f32.mrb[0].mxu0
    %v2032 = vpop.f32.mrb[0].mxu0
    %2033 = vdwg.mxu0
    %2034 = vmatprep.subr.bf16.mxu0 0
    %2035 = vmatpush1.bf16.msra.mxu0 %v1658
    %2036 = vmatprep.subr.bf16.mxu0 0
    %2037 = vmatpush1.bf16.msra.mxu0 %v1659
    %2038 = vmatprep.subr.bf16.mxu0 0
    %2039 = vmatpush1.bf16.msra.mxu0 %v1660
    %2040 = vmatprep.subr.bf16.mxu0 0
    %2041 = vmatpush1.bf16.msra.mxu0 %v1661
    %2042 = vmatprep.subr.bf16.mxu0 0
    %2043 = vmatpush1.bf16.msra.mxu0 %v1662
    %2044 = vmatprep.subr.bf16.mxu0 0
    %2045 = vmatpush1.bf16.msra.mxu0 %v1663
    %2046 = vmatprep.subr.bf16.mxu0 0
    %2047 = vmatpush1.bf16.msra.mxu0 %v1664
    %2048 = vmatprep.subr.bf16.mxu0 0
    %2049 = vmatpush1.bf16.msra.mxu0 %v1665
    %2050 = vmatprep.subr.bf16.mxu0 0
    %2051 = vmatpush1.bf16.msra.mxu0 %v1666
    %2052 = vmatprep.subr.bf16.mxu0 0
    %2053 = vmatpush1.bf16.msra.mxu0 %v1667
    %2054 = vmatprep.subr.bf16.mxu0 0
    %2055 = vmatpush1.bf16.msra.mxu0 %v1668
    %2056 = vmatprep.subr.bf16.mxu0 0
    %2057 = vmatpush1.bf16.msra.mxu0 %v1669
    %2058 = vmatprep.subr.bf16.mxu0 0
    %2059 = vmatpush1.bf16.msra.mxu0 %v1670
    %2060 = vmatprep.subr.bf16.mxu0 0
    %2061 = vmatpush1.bf16.msra.mxu0 %v1671
    %2062 = vmatprep.subr.bf16.mxu0 0
    %2063 = vmatpush1.bf16.msra.mxu0 %v1672
    %2064 = vmatprep.subr.bf16.mxu0 0
    %2065 = vmatpush1.bf16.msra.mxu0 %v1673
    %2066 = vmatprep.mubr.bf16.mxu0 %v798
    %2067 = vmatmul.mubr.bf16.gmra.mrb[0].mxu0 %v797
    %v2068 = vpop.f32.mrb[0].mxu0
    %v2069 = vadd.f32 %v2029, %v2068
    %v2070 = vpop.f32.mrb[0].mxu0
    %v2071 = vpop.f32.mrb[0].mxu0
    %v2072 = vpop.f32.mrb[0].mxu0
    %2073 = vdwg.mxu0
    %2074 = vmatprep.subr.bf16.mxu0 0
    %2075 = vmatpush1.bf16.msra.mxu0 %v1674
    %2076 = vmatprep.subr.bf16.mxu0 0
    %2077 = vmatpush1.bf16.msra.mxu0 %v1675
    %2078 = vmatprep.subr.bf16.mxu0 0
    %2079 = vmatpush1.bf16.msra.mxu0 %v1676
    %2080 = vmatprep.subr.bf16.mxu0 0
    %2081 = vmatpush1.bf16.msra.mxu0 %v1677
    %2082 = vmatprep.subr.bf16.mxu0 0
    %2083 = vmatpush1.bf16.msra.mxu0 %v1678
    %2084 = vmatprep.subr.bf16.mxu0 0
    %2085 = vmatpush1.bf16.msra.mxu0 %v1679
    %2086 = vmatprep.subr.bf16.mxu0 0
    %2087 = vmatpush1.bf16.msra.mxu0 %v1680
    %2088 = vmatprep.subr.bf16.mxu0 0
    %2089 = vmatpush1.bf16.msra.mxu0 %v1681
    %2090 = vmatprep.subr.bf16.mxu0 0
    %2091 = vmatpush1.bf16.msra.mxu0 %v1682
    %2092 = vmatprep.subr.bf16.mxu0 0
    %2093 = vmatpush1.bf16.msra.mxu0 %v1683
    %2094 = vmatprep.subr.bf16.mxu0 0
    %2095 = vmatpush1.bf16.msra.mxu0 %v1684
    %2096 = vmatprep.subr.bf16.mxu0 0
    %2097 = vmatpush1.bf16.msra.mxu0 %v1685
    %2098 = vmatprep.subr.bf16.mxu0 0
    %2099 = vmatpush1.bf16.msra.mxu0 %v1686
    %2100 = vmatprep.subr.bf16.mxu0 0
    %2101 = vmatpush1.bf16.msra.mxu0 %v1687
    %2102 = vmatprep.subr.bf16.mxu0 0
    %2103 = vmatpush1.bf16.msra.mxu0 %v1688
    %2104 = vmatprep.subr.bf16.mxu0 0
    %2105 = vmatpush1.bf16.msra.mxu0 %v1689
    %2106 = vmatprep.mubr.bf16.mxu0 %v800
    %2107 = vmatmul.mubr.bf16.gmra.mrb[0].mxu0 %v799
    %v2108 = vpop.f32.mrb[0].mxu0
    %v2109 = vadd.f32 %v2069, %v2108
    %v2110 = vpop.f32.mrb[0].mxu0
    %v2111 = vpop.f32.mrb[0].mxu0
    %v2112 = vpop.f32.mrb[0].mxu0
    %2113 = vdwg.mxu0
    %2114 = vmatprep.subr.bf16.mxu0 0
    %2115 = vmatpush1.bf16.msra.mxu0 %v1690
    %2116 = vmatprep.subr.bf16.mxu0 0
    %2117 = vmatpush1.bf16.msra.mxu0 %v1691
    %2118 = vmatprep.subr.bf16.mxu0 0
    %2119 = vmatpush1.bf16.msra.mxu0 %v1692
    %2120 = vmatprep.subr.bf16.mxu0 0
    %2121 = vmatpush1.bf16.msra.mxu0 %v1693
    %2122 = vmatprep.subr.bf16.mxu0 0
    %2123 = vmatpush1.bf16.msra.mxu0 %v1694
    %2124 = vmatprep.subr.bf16.mxu0 0
    %2125 = vmatpush1.bf16.msra.mxu0 %v1695
    %2126 = vmatprep.subr.bf16.mxu0 0
    %2127 = vmatpush1.bf16.msra.mxu0 %v1696
    %2128 = vmatprep.subr.bf16.mxu0 0
    %2129 = vmatpush1.bf16.msra.mxu0 %v1697
    %2130 = vmatprep.subr.bf16.mxu0 0
    %2131 = vmatpush1.bf16.msra.mxu0 %v1698
    %2132 = vmatprep.subr.bf16.mxu0 0
    %2133 = vmatpush1.bf16.msra.mxu0 %v1699
    %2134 = vmatprep.subr.bf16.mxu0 0
    %2135 = vmatpush1.bf16.msra.mxu0 %v1700
    %2136 = vmatprep.subr.bf16.mxu0 0
    %2137 = vmatpush1.bf16.msra.mxu0 %v1701
    %2138 = vmatprep.subr.bf16.mxu0 0
    %2139 = vmatpush1.bf16.msra.mxu0 %v1702
    %2140 = vmatprep.subr.bf16.mxu0 0
    %2141 = vmatpush1.bf16.msra.mxu0 %v1703
    %2142 = vmatprep.subr.bf16.mxu0 0
    %2143 = vmatpush1.bf16.msra.mxu0 %v1704
    %2144 = vmatprep.subr.bf16.mxu0 0
    %2145 = vmatpush1.bf16.msra.mxu0 %v1705
    %2146 = vmatprep.mubr.bf16.mxu0 %v802
    %2147 = vmatmul.mubr.bf16.gmra.mrb[0].mxu0 %v801
    %v2148 = vpop.f32.mrb[0].mxu0
    %v2149 = vadd.f32 %v2109, %v2148
    %v2150 = vpop.f32.mrb[0].mxu0
    %v2151 = vpop.f32.mrb[0].mxu0
    %v2152 = vpop.f32.mrb[0].mxu0
    %2153 = vdwg.mxu0
    %v2154 = vmax.f32 %v2149, 0.0
    %v2155 = vpack.c.bf16 %v2154, %v2154
    %v2156 = vld [vmem:[%s7] sm:$0xf]
    %v2157 = vld [vmem:[%s7 + $0x4] sm:$0xf]
    %v2158 = vld [vmem:[%s7 + $0x8] sm:$0xf]
    %v2159 = vld [vmem:[%s7 + $0xc] sm:$0xf]
    %v2160 = vld [vmem:[%s8] sm:$0x1]
    %v2162 = vlaneseq
    %v2163 = vshrl.u32 %v2162, 7
    %v2164 = vsub.s32 0, %v2163
    %v2165 = vrot.slane %v2160, %v2164
    %v2171 = vunpack.c.l.b16 %v2156
    %v2172 = vunpack.c.l.b16 %v2157
    %v2173 = vunpack.c.l.b16 %v2158
    %v2174 = vunpack.c.l.b16 %v2159
    %v2175 = vpack.c.b16 %v2172, %v2171
    %v2176 = vpack.c.b16 %v2174, %v2173
    %vm2179 = vcmask 261120
    %v2181 = vsel %vm2179, %v2155, 0
    %2183 = vmatprep.subr.bf16.mxu0 0
    %2184 = vmatpush1.bf16.msra.mxu0 %v2175
    %2185 = vmatprep.subr.bf16.mxu0 0
    %2186 = vmatpush1.bf16.msra.mxu0 %v2176
    %2187 = vmatprep.subr.bf16.mxu0 0
    %2188 = vmatpush1.bf16.msra.mxu0 0
    %2189 = vmatprep.subr.bf16.mxu0 0
    %2190 = vmatpush1.bf16.msra.mxu0 0
    %2191 = vmatprep.subr.bf16.mxu0 0
    %2192 = vmatpush1.bf16.msra.mxu0 0
    %2193 = vmatprep.subr.bf16.mxu0 0
    %2194 = vmatpush1.bf16.msra.mxu0 0
    %2195 = vmatprep.subr.bf16.mxu0 0
    %2196 = vmatpush1.bf16.msra.mxu0 0
    %2197 = vmatprep.subr.bf16.mxu0 0
    %2198 = vmatpush1.bf16.msra.mxu0 0
    %2199 = vmatprep.subr.bf16.mxu0 0
    %2200 = vmatpush1.bf16.msra.mxu0 0
    %2201 = vmatprep.subr.bf16.mxu0 0
    %2202 = vmatpush1.bf16.msra.mxu0 0
    %2203 = vmatprep.subr.bf16.mxu0 0
    %2204 = vmatpush1.bf16.msra.mxu0 0
    %2205 = vmatprep.subr.bf16.mxu0 0
    %2206 = vmatpush1.bf16.msra.mxu0 0
    %2207 = vmatprep.subr.bf16.mxu0 0
    %2208 = vmatpush1.bf16.msra.mxu0 0
    %2209 = vmatprep.subr.bf16.mxu0 0
    %2210 = vmatpush1.bf16.msra.mxu0 0
    %2211 = vmatprep.subr.bf16.mxu0 0
    %2212 = vmatpush1.bf16.msra.mxu0 0
    %2213 = vmatprep.subr.bf16.mxu0 0
    %2214 = vmatpush1.bf16.msra.mxu0 0
    %2215 = vmatprep.mubr.bf16.mxu0 0
    %2216 = vmatmul.mubr.bf16.gmra.mrb[0].mxu0 %v2181
    %v2217 = vpop.f32.mrb[0].mxu0
    %v2218 = vadd.f32 %v2165, %v2217
    %v2219 = vpop.f32.mrb[0].mxu0
    %v2220 = vpop.f32.mrb[0].mxu0
    %v2221 = vpop.f32.mrb[0].mxu0
    %2222 = vdwg.mxu0
    %vm2223 = vcmask 74752
    %2224 = vst.msk [vmem:[#allocation6] sm:$0x3] %vm2223, %v2218
    // Predicated region
    $region38: #{_lambda_.1} parent=1 // pred_check
      _
    $region39: #{_lambda_.1} parent=1 // pred_check_branch
      %2226 = sbr.rel (0) target = $region41
    $region40: #{_lambda_.1} parent=1 // pred_region
      %s2228 = ssub.s32 32, 32
      %2229 = vsyncadd [#allocation7], %s2228
      %s2231 = sshll.u32 [#allocation6], 4
      %s2232 = int_to_ptr.vmem [resolvable:$true] %s2231
      %2234 = dma.vmem_to_hbm [thread:$0]  %s2232, 32, %s9, [#allocation7]
    $region41: #{_lambda_.1} parent=1 // pred_fallthru
      _
    // Predicated region
    $region42: #{_lambda_.1} parent=1 // pred_check
      _
    $region43: #{_lambda_.1} parent=1 // pred_check_branch
      %2236 = sbr.rel (0) target = $region45
    $region44: #{_lambda_.1} parent=1 // pred_region
      %2237 = dma.done [#allocation7], 32
    $region45: #{_lambda_.1} parent=1 // pred_fallthru
      _
    %2238 = vsyncpa [#allocation7], 1

</llo_original>
